<compile_context>
chip_gen: v5e
topology: v5e:2x2
jax: 0.10.0
libtpu: 0.0.40
codegen_flags: <defaults>
</compile_context>

<pallas_src>
import functools

import jax
import jax.numpy as jnp
from jax import lax
from jax.experimental import pallas as pl
from jax.experimental.pallas import tpu as pltpu


def _round_up(x, m):
    return (x + m - 1) // m * m


# ----------------------------- Pallas kernels ------------------------------ #

def _gram_at_kernel(x_ref, w_ref, g_ref, at_ref, *, n_rows, steps):
    """One N tile: emit A_tile.T (lane-dense) and accumulate this core's Gram.

    g_ref is the (K, K) output block for this core; its block index is constant
    along the "arbitrary" axis, so it stays VMEM-resident and is the accumulator.
    """
    c = pl.program_id(0)          # core slice of the N-tile reduction
    i = pl.program_id(1)          # step within this core's slice
    tm = x_ref.shape[0]

    @pl.when(i == 0)
    def _():
        g_ref[...] = jnp.zeros_like(g_ref)

    # A_tile.T = W @ x_tile.T : (K, TM).  Rows of x land on the 128-lane axis so
    # the at_ref store is lane-dense; no transposes are materialized.
    at = lax.dot_general(
        w_ref[...], x_ref[...],
        dimension_numbers=(((1,), (1,)), ((), ())),
        preferred_element_type=jnp.float32,
    )

    # Cache A.T for pass 2 (x is then read from HBM exactly once overall).
    # Stored UNMASKED: duplicate / ragged tiles rewrite identical data or data
    # that is never consumed (U rows >= N are dropped by the partial out block).
    at_ref[...] = at.astype(at_ref.dtype)

    # Mask logical rows >= N (ragged last tile, or fully out-of-range duplicate
    # tiles when gn does not split evenly across cores) before the Gram
    # accumulate -- this replaces the old host-side zero-pad copy of x.
    t = c * steps + i
    row = t * tm + lax.broadcasted_iota(jnp.int32, at.shape, 1)
    at_m = jnp.where(row < n_rows, at, 0.0)

    # G += A_tile.T @ A_tile  (contract the TM / lane axis of both operands).
    g_ref[...] += lax.dot_general(
        at_m, at_m,
        dimension_numbers=(((1,), (1,)), ((), ())),
        preferred_element_type=jnp.float32,
    )


def _u_kernel(at_ref, m_ref, u_ref):
    """U_tile = A_tile @ M = at_tile.T @ M -> (TM, K), stored directly as (N, K)."""
    u_ref[...] = lax.dot_general(
        at_ref[...], m_ref[...],
        dimension_numbers=(((0,), (0,)), ((), ())),
        preferred_element_type=jnp.float32,
    ).astype(u_ref.dtype)


# ------------------------------ Glue (XLA) --------------------------------- #

def _scaled_right_vectors(gram):
    """M = V * S^{-1} from the K x K Gram, so U = A @ M (thin-SVD left factor)."""
    evals, evecs = jnp.linalg.eigh(gram)               # ascending
    evals = evals[::-1]                                # descending (SVD order)
    v = evecs[:, ::-1]
    s = jnp.sqrt(jnp.clip(evals, 0.0))
    # Epsilon clamp: avoid inf/NaN for (near-)rank-deficient A.
    eps = jnp.float32(1e-6) * jnp.maximum(s[0], jnp.float32(1e-30))
    inv_s = 1.0 / jnp.maximum(s, eps)
    return v * inv_s[None, :]                          # (K, K)


# ------------------------------ Wrapper ------------------------------------ #

def grassmannian_mapping(x, w, *, block_rows=8192, small_n_threshold=2048):
    """x: (N, D), w: (K, D)  ->  U: (N, K), left factor of the thin SVD of x @ w.T."""
    n, d = x.shape
    k, d2 = w.shape
    assert d == d2
    w = w.astype(x.dtype)      # keep the caller's dtype (e.g. bf16) on the MXU path

    # Small-N fast path: the Pallas machinery only pays off when streaming x is
    # the dominant cost.
    if n <= max(small_n_threshold, k):
        a = jnp.dot(x, w.T, preferred_element_type=jnp.float32)
        m = _scaled_right_vectors(a.T @ a)
        return (a @ m).astype(x.dtype)

    # N tile: multiple of 128 (lane-dense A.T blocks), capped so a lane-padded
    # x buffer stays ~4 MiB (double-buffered ~8 MiB: fits every generation's
    # scoped-VMEM default, including v7x's 64 MiB physical VMEM).
    lane_d = _round_up(d, 128)
    rows_cap = max(128, ((4 * 1024 * 1024) // (lane_d * x.dtype.itemsize)) // 128 * 128)
    tm = min(_round_up(block_rows, 128), rows_cap, _round_up(n, 128))
    gn = pl.cdiv(n, tm)

    # Split the N-tile reduction across TensorCores (2 on v7x; a plain outer
    # loop on v5e/v6e), producing one partial Gram per core slice.
    ncore = 2 if gn >= 2 else 1
    steps = pl.cdiv(gn, ncore)

    def x_map(c, i):
        return (jnp.minimum(c * steps + i, gn - 1), 0)

    def at_map(c, i):
        return (0, jnp.minimum(c * steps + i, gn - 1))

    # ---- Pass 1: A.T cache + per-core K x K Gram, streamed over N ---------- #
    gram_cost = pl.CostEstimate(
        flops=2 * gn * tm * d * k + 2 * gn * tm * k * k,
        transcendentals=0,
        bytes_accessed=int(x.dtype.itemsize) * n * d
                       + 4 * (k * d + gn * tm * k + ncore * k * k),
    )
    gram_parts, a_t = pl.pallas_call(
        functools.partial(_gram_at_kernel, n_rows=n, steps=steps),
        out_shape=(
            jax.ShapeDtypeStruct((ncore, k, k), jnp.float32),    # partial Grams
            jax.ShapeDtypeStruct((k, gn * tm), jnp.float32),     # A.T cache
        ),
        grid=(ncore, steps),
        in_specs=[
            pl.BlockSpec((tm, d), x_map),                  # x tile (ragged last tile ok)
            pl.BlockSpec((k, d), lambda c, i: (0, 0)),     # W, whole array
        ],
        out_specs=(
            pl.BlockSpec((None, k, k), lambda c, i: (c, 0, 0)),  # resident accumulator
            pl.BlockSpec((k, tm), at_map),                       # lane-dense A.T tile
        ),
        compiler_params=pltpu.CompilerParams(
            dimension_semantics=("parallel", "arbitrary"),
            vmem_limit_bytes=32 * 1024 * 1024),
        cost_estimate=gram_cost,
    )(x, w)

    # ---- Glue: tiny K x K eigh (no Pallas equivalent for SVD) -------------- #
    m = _scaled_right_vectors(gram_parts.sum(axis=0))      # (K, K)

    # ---- Pass 2: U = A @ M from the cached A.T, written directly as (N, K) - #
    u_cost = pl.CostEstimate(
        flops=2 * gn * tm * k * k,
        transcendentals=0,
        bytes_accessed=4 * (gn * tm * k + k * k) + int(x.dtype.itemsize) * n * k,
    )
    u = pl.pallas_call(
        _u_kernel,
        out_shape=jax.ShapeDtypeStruct((n, k), x.dtype),
        grid=(gn,),
        in_specs=[
            pl.BlockSpec((k, tm), lambda i: (0, i)),       # cached A.T tile
            pl.BlockSpec((k, k), lambda i: (0, 0)),        # folded V * S^{-1}
        ],
        out_specs=pl.BlockSpec((tm, k), lambda i: (i, 0)),  # no trailing XLA transpose
        compiler_params=pltpu.CompilerParams(
            dimension_semantics=("parallel",),
            vmem_limit_bytes=32 * 1024 * 1024),
        cost_estimate=u_cost,
    )(a_t, m)

    return u


# ------------------------------ Test driver -------------------------------- #

if __name__ == "__main__":
    feature_dim = 32
    subspace_dim = 8
    n = 1000   # multi-tile accumulation + ragged last tile at block_rows=256

    key = jax.random.PRNGKey(0)
    kx, kw = jax.random.split(key)

    x = jax.random.normal(kx, (n, feature_dim), dtype=jnp.float32)
    # Deterministic init mimicking nn.Linear default: U(-1/sqrt(D), 1/sqrt(D))
    bound = 1.0 / (feature_dim ** 0.5)
    w = jax.random.uniform(
        kw, (subspace_dim, feature_dim), dtype=jnp.float32,
        minval=-bound, maxval=bound,
    )

    fwd = jax.jit(grassmannian_mapping,
                  static_argnames=("block_rows", "small_n_threshold"))

    # Small tile + zero threshold so the Pallas path (multi-tile Gram accumulate,
    # 2-way core split, ragged last tile, A.T cache, direct (N,K) store) runs.
    u = jax.block_until_ready(fwd(x, w, block_rows=256, small_n_threshold=0))

    # Validate thin-SVD left-factor properties (columns match torch.svd up to the
    # usual per-column sign / degenerate-cluster rotation ambiguity).
    a_ref = x @ w.T
    ortho_err = jnp.max(jnp.abs(u.T @ u - jnp.eye(subspace_dim)))
    recon_err = jnp.max(jnp.abs(u @ (u.T @ a_ref) - a_ref)) / jnp.max(jnp.abs(a_ref))
    assert u.shape == (n, subspace_dim)
    assert float(ortho_err) < 1e-3, float(ortho_err)
    assert float(recon_err) < 1e-3, float(recon_err)

    # Cross-check against the small-N XLA fast path: same column space.
    u_fast = jax.block_until_ready(fwd(x, w))
    span_err = jnp.max(jnp.abs(u_fast - u @ (u.T @ u_fast)))
    assert float(span_err) < 1e-3, float(span_err)

    print("KERNEL_OK")
</pallas_src>

<mosaic_0001>
module attributes {stable_mosaic.version = 11 : i64} {
  func.func @_gram_at_kernel(%arg0: i32, %arg1: i32, %arg2: memref<256x32xf32, #tpu.memory_space<vmem>>, %arg3: memref<8x32xf32, #tpu.memory_space<vmem>>, %arg4: memref<1x8x8xf32, #tpu.memory_space<vmem>>, %arg5: memref<8x256xf32, #tpu.memory_space<vmem>>) attributes {dimension_semantics = [#tpu.dimension_semantics<parallel>, #tpu.dimension_semantics<arbitrary>], iteration_bounds = array<i64: 2, 2>, scalar_prefetch = 0 : i64, scratch_operands = 0 : i64, tpu.core_type = #tpu.core_type<tc>, window_params = [{transform_indices = @transform_0, window_bounds = array<i64: 256, 32>}, {pipeline_mode = #tpu.pipeline_mode<synchronous>, transform_indices = @transform_1, window_bounds = array<i64: 8, 32>}, {transform_indices = @transform_2, window_bounds = array<i64: 1, 8, 8>}, {transform_indices = @transform_3, window_bounds = array<i64: 8, 256>}]} {
    %c0_i32 = arith.constant 0 : i32
    %0 = arith.cmpi eq, %arg1, %c0_i32 : i32
    %1 = arith.extui %0 : i1 to i32
    %c0_i32_0 = arith.constant 0 : i32
    %2 = arith.cmpi ne, %1, %c0_i32_0 : i32
    scf.if %2 {
      %cst_14 = arith.constant 0.000000e+00 : f32
      %24 = vector.broadcast %cst_14 : f32 to vector<8x8xf32>
      %c0_15 = arith.constant 0 : index
      %c0_16 = arith.constant 0 : index
      %c0_17 = arith.constant 0 : index
      %25 = vector.load %arg4[%c0_15, %c0_16, %c0_17] : memref<1x8x8xf32, #tpu.memory_space<vmem>>, vector<1x8x8xf32>
      %26 = vector.shape_cast %25 : vector<1x8x8xf32> to vector<8x8xf32>
      %27 = vector.shape_cast %24 : vector<8x8xf32> to vector<1x8x8xf32>
      tpu.vector_store %arg4[%c0_15, %c0_16, %c0_17], %27 {strides = array<i32>} : memref<1x8x8xf32, #tpu.memory_space<vmem>>, vector<1x8x8xf32>,
    } else {
    }
    %c0 = arith.constant 0 : index
    %c0_1 = arith.constant 0 : index
    %3 = vector.load %arg3[%c0, %c0_1] : memref<8x32xf32, #tpu.memory_space<vmem>>, vector<8x32xf32>
    %c0_2 = arith.constant 0 : index
    %c0_3 = arith.constant 0 : index
    %4 = vector.load %arg2[%c0_2, %c0_3] : memref<256x32xf32, #tpu.memory_space<vmem>>, vector<256x32xf32>
    %cst = arith.constant dense<0.000000e+00> : vector<8x256xf32>
    %5 = tpu.matmul %3, %4, %cst {dimension_numbers = #tpu.dot_dimension_numbers<[1], [1], [0], [0], [0, 0, 1, 0], [], []>} : vector<8x32xf32>, vector<256x32xf32>, vector<8x256xf32> -> vector<8x256xf32>
    %c0_4 = arith.constant 0 : index
    %c0_5 = arith.constant 0 : index
    %6 = vector.load %arg5[%c0_4, %c0_5] : memref<8x256xf32, #tpu.memory_space<vmem>>, vector<8x256xf32>
    tpu.vector_store %arg5[%c0_4, %c0_5], %5 {strides = array<i32>} : memref<8x256xf32, #tpu.memory_space<vmem>>, vector<8x256xf32>,
    %c2_i32 = arith.constant 2 : i32
    %7 = arith.muli %arg0, %c2_i32 : i32
    %8 = arith.addi %7, %arg1 : i32
    %c256_i32 = arith.constant 256 : i32
    %9 = arith.muli %8, %c256_i32 : i32
    %10 = tpu.iota {dimensions = array<i32: 1>} : vector<8x256xi32>
    %11 = vector.broadcast %9 : i32 to vector<8x256xi32>
    %12 = arith.addi %11, %10 : vector<8x256xi32>
    %c1000_i32 = arith.constant 1000 : i32
    %13 = vector.broadcast %c1000_i32 : i32 to vector<8x256xi32>
    %14 = arith.cmpi slt, %12, %13 : vector<8x256xi32>
    %cst_6 = arith.constant 0.000000e+00 : f32
    %15 = vector.broadcast %cst_6 : f32 to vector<8x256xf32>
    %16 = arith.select %14, %5, %15 : vector<8x256xi1>, vector<8x256xf32>
    %c0_7 = arith.constant 0 : index
    %c0_8 = arith.constant 0 : index
    %c0_9 = arith.constant 0 : index
    %17 = vector.load %arg4[%c0_7, %c0_8, %c0_9] : memref<1x8x8xf32, #tpu.memory_space<vmem>>, vector<1x8x8xf32>
    %18 = vector.shape_cast %17 : vector<1x8x8xf32> to vector<8x8xf32>
    %cst_10 = arith.constant dense<0.000000e+00> : vector<8x8xf32>
    %19 = tpu.matmul %16, %16, %cst_10 {dimension_numbers = #tpu.dot_dimension_numbers<[1], [1], [0], [0], [0, 0, 1, 0], [], []>} : vector<8x256xf32>, vector<8x256xf32>, vector<8x8xf32> -> vector<8x8xf32>
    %20 = arith.addf %18, %19 : vector<8x8xf32>
    %c0_11 = arith.constant 0 : index
    %c0_12 = arith.constant 0 : index
    %c0_13 = arith.constant 0 : index
    %21 = vector.load %arg4[%c0_11, %c0_12, %c0_13] : memref<1x8x8xf32, #tpu.memory_space<vmem>>, vector<1x8x8xf32>
    %22 = vector.shape_cast %21 : vector<1x8x8xf32> to vector<8x8xf32>
    %23 = vector.shape_cast %20 : vector<8x8xf32> to vector<1x8x8xf32>
    tpu.vector_store %arg4[%c0_11, %c0_12, %c0_13], %23 {strides = array<i32>} : memref<1x8x8xf32, #tpu.memory_space<vmem>>, vector<1x8x8xf32>,
    return
  }
  func.func @transform_0(%arg0: i32, %arg1: i32) -> (i32, i32) {
    %c2_i32 = arith.constant 2 : i32
    %0 = arith.muli %arg0, %c2_i32 : i32
    %1 = arith.addi %0, %arg1 : i32
    %c3_i32 = arith.constant 3 : i32
    %2 = arith.minsi %1, %c3_i32 : i32
    %c0_i32 = arith.constant 0 : i32
    %c0_i32_0 = arith.constant 0 : i32
    return %2, %c0_i32 : i32, i32
  }
  func.func @transform_1(%arg0: i32, %arg1: i32) -> (i32, i32) {
    %c0_i32 = arith.constant 0 : i32
    %c0_i32_0 = arith.constant 0 : i32
    %c0_i32_1 = arith.constant 0 : i32
    return %c0_i32, %c0_i32_0 : i32, i32
  }
  func.func @transform_2(%arg0: i32, %arg1: i32) -> (i32, i32, i32) {
    %c0_i32 = arith.constant 0 : i32
    %c0_i32_0 = arith.constant 0 : i32
    %c0_i32_1 = arith.constant 0 : i32
    return %arg0, %c0_i32, %c0_i32_0 : i32, i32, i32
  }
  func.func @transform_3(%arg0: i32, %arg1: i32) -> (i32, i32) {
    %c2_i32 = arith.constant 2 : i32
    %0 = arith.muli %arg0, %c2_i32 : i32
    %1 = arith.addi %0, %arg1 : i32
    %c3_i32 = arith.constant 3 : i32
    %2 = arith.minsi %1, %c3_i32 : i32
    %c0_i32 = arith.constant 0 : i32
    %c0_i32_0 = arith.constant 0 : i32
    return %c0_i32, %2 : i32, i32
  }
}

module attributes {stable_mosaic.version = 11 : i64} {
  func.func @_u_kernel(%arg0: i32, %arg1: memref<8x256xf32, #tpu.memory_space<vmem>>, %arg2: memref<8x8xf32, #tpu.memory_space<vmem>>, %arg3: memref<256x8xf32, #tpu.memory_space<vmem>>) attributes {dimension_semantics = [#tpu.dimension_semantics<parallel>], iteration_bounds = array<i64: 4>, scalar_prefetch = 0 : i64, scratch_operands = 0 : i64, tpu.core_type = #tpu.core_type<tc>, window_params = [{transform_indices = @transform_0, window_bounds = array<i64: 8, 256>}, {pipeline_mode = #tpu.pipeline_mode<synchronous>, transform_indices = @transform_1, window_bounds = array<i64: 8, 8>}, {transform_indices = @transform_2, window_bounds = array<i64: 256, 8>}]} {
    %c0 = arith.constant 0 : index
    %c0_0 = arith.constant 0 : index
    %0 = vector.load %arg1[%c0, %c0_0] : memref<8x256xf32, #tpu.memory_space<vmem>>, vector<8x256xf32>
    %c0_1 = arith.constant 0 : index
    %c0_2 = arith.constant 0 : index
    %1 = vector.load %arg2[%c0_1, %c0_2] : memref<8x8xf32, #tpu.memory_space<vmem>>, vector<8x8xf32>
    %cst = arith.constant dense<0.000000e+00> : vector<256x8xf32>
    %2 = tpu.matmul %0, %1, %cst {dimension_numbers = #tpu.dot_dimension_numbers<[0], [0], [1], [1], [0, 1, 1, 1], [], []>} : vector<8x256xf32>, vector<8x8xf32>, vector<256x8xf32> -> vector<256x8xf32>
    %c0_3 = arith.constant 0 : index
    %c0_4 = arith.constant 0 : index
    %3 = vector.load %arg3[%c0_3, %c0_4] : memref<256x8xf32, #tpu.memory_space<vmem>>, vector<256x8xf32>
    tpu.vector_store %arg3[%c0_3, %c0_4], %2 {strides = array<i32>} : memref<256x8xf32, #tpu.memory_space<vmem>>, vector<256x8xf32>,
    return
  }
  func.func @transform_0(%arg0: i32) -> (i32, i32) {
    %c0_i32 = arith.constant 0 : i32
    %c0_i32_0 = arith.constant 0 : i32
    return %c0_i32, %arg0 : i32, i32
  }
  func.func @transform_1(%arg0: i32) -> (i32, i32) {
    %c0_i32 = arith.constant 0 : i32
    %c0_i32_0 = arith.constant 0 : i32
    %c0_i32_1 = arith.constant 0 : i32
    return %c0_i32, %c0_i32_0 : i32, i32
  }
  func.func @transform_2(%arg0: i32) -> (i32, i32) {
    %c0_i32 = arith.constant 0 : i32
    %c0_i32_0 = arith.constant 0 : i32
    return %arg0, %c0_i32 : i32, i32
  }
}

</mosaic_0001>

<llo_original>
// kernel: custom-call.2
$region0: #{custom-call.2}
  %s0 = inlined_call_operand.vmem [shape: f32[4,4], index: 0, kind: input, shape index: {}]
  %s1 = inlined_call_operand.vmem [shape: f32[4,4], index: 1, kind: input, shape index: {}]
  %s2 = inlined_call_operand.vmem [shape: f32[4,4], index: 2, kind: input, shape index: {}]
  %s3 = inlined_call_operand.vmem [shape: f32[4,4], index: 3, kind: input, shape index: {}]
  %s4 = inlined_call_operand.vmem [shape: f32[4], index: 4, kind: output, shape index: {0}]
  %s5 = inlined_call_operand.vmem [shape: f32[4], index: 5, kind: output, shape index: {1}]
  %s6 = inlined_call_operand.vmem [shape: f32[4,4], index: 6, kind: output, shape index: {2}]
  %s7 = inlined_call_operand.vmem [shape: f32[4,4], index: 7, kind: output, shape index: {3}]
  %s8 = inlined_call_operand.vmem [shape: f32[4,4], index: 8, kind: output, shape index: {4}]
  %s9 = inlined_call_operand.vmem [shape: f32[4,4], index: 9, kind: output, shape index: {5}]
  %10 = xla_tuple %s4, %s5, %s6, %s7, %s8, %s9
  $region1: #{custom-call.2} parent=0
    #allocation0 [shape = 'u8[4096]{0}', space=vmem, size = 0x1000, scoped, tag = 'operand span for operand 0']
    #allocation1 [shape = 'u8[2048]{0}', space=vmem, size = 0x800, scoped, tag = 'packed  for operand 0']
    #allocation2 [shape = 'u8[4096]{0}', space=vmem, size = 0x1000, scoped, tag = 'operand span for operand 1']
    #allocation3 [shape = 'u8[2048]{0}', space=vmem, size = 0x800, scoped, tag = 'packed  for operand 1']
    #allocation4 [shape = 'u8[4096]{0}', space=vmem, size = 0x1000, scoped, tag = 'operand span for operand 2']
    #allocation5 [shape = 'u8[2048]{0}', space=vmem, size = 0x800, scoped, tag = 'packed  for operand 2']
    #allocation6 [shape = 'u8[4096]{0}', space=vmem, size = 0x1000, scoped, tag = 'operand span for operand 3']
    #allocation7 [shape = 'u8[2048]{0}', space=vmem, size = 0x800, scoped, tag = 'packed  for operand 3']
    #allocation8 [shape = 'u8[4096]{0}', space=vmem, size = 0x1000, scoped, tag = 'operand span for operand 4']
    #allocation9 [shape = 'u8[512]{0}', space=vmem, size = 0x400, scoped, tag = 'packed  for operand 4']
    #allocation10 [shape = 'u8[4096]{0}', space=vmem, size = 0x1000, scoped, tag = 'operand span for operand 5']
    #allocation11 [shape = 'u8[512]{0}', space=vmem, size = 0x400, scoped, tag = 'packed  for operand 5']
    #allocation12 [shape = 'u8[4096]{0}', space=vmem, size = 0x1000, scoped, tag = 'operand span for operand 6']
    #allocation13 [shape = 'u8[2048]{0}', space=vmem, size = 0x800, scoped, tag = 'packed  for operand 6']
    #allocation14 [shape = 'u8[4096]{0}', space=vmem, size = 0x1000, scoped, tag = 'operand span for operand 7']
    #allocation15 [shape = 'u8[2048]{0}', space=vmem, size = 0x800, scoped, tag = 'packed  for operand 7']
    #allocation16 [shape = 'u8[4096]{0}', space=vmem, size = 0x1000, scoped, tag = 'operand span for operand 8']
    #allocation17 [shape = 'u8[2048]{0}', space=vmem, size = 0x800, scoped, tag = 'packed  for operand 8']
    #allocation18 [shape = 'u8[4096]{0}', space=vmem, size = 0x1000, scoped, tag = 'operand span for operand 9']
    #allocation19 [shape = 'u8[2048]{0}', space=vmem, size = 0x800, scoped, tag = 'packed  for operand 9']
    #allocation20 [shape = 'f32[4,4]{1,0}', space=vmem, size = 0x1000, scoped, tag = 'a top-left matrix']
    #allocation21 [shape = 'f32[4,4]{1,0}', space=vmem, size = 0x1000, scoped, tag = 'a top-right matrix']
    #allocation22 [shape = 'f32[4,4]{1,0}', space=vmem, size = 0x1000, scoped, tag = 'a bottom-left matrix']
    #allocation23 [shape = 'f32[4,4]{1,0}', space=vmem, size = 0x1000, scoped, tag = 'a bottom-right matrix']
    // Predicated region
    $region2: #{custom-call.2} parent=1 // pred_check
      _
    $region3: #{custom-call.2} parent=1 // pred_check_branch
      %12 = sbr.rel (0) target = $region5
    $region4: #{custom-call.2} parent=1 // pred_region
      %p14 = scmp.gt.s32.totalorder 0, 0
      // Predicated region
      $region6: #{custom-call.2} parent=4 // pred_check
        %p15 = pneg %p14
      $region7: #{custom-call.2} parent=4 // pred_check_branch
        %17 = sbr.rel (%p15) target = $region9
      $region8: #{custom-call.2} parent=4 // pred_region
        %s18 = ssub.s32 0, 1
        %s19 = smul.u32 %s18, 8
        %s20 = scalar_lea.vmem %s0, %s19
        %v21 = vld [vmem:[%s0] sm:$0xff]
        // While loop
        $region10: #{custom-call.2} parent=8 // loop_pre_header
          _
        $region11: #{custom-call.2} parent=8 // loop_header
          %s22 = sphi %s0, %s44
          %s23 = sphi [#allocation1], %s45
          %v24 = vphi %v21, %v46
          %s25 = ssub.s32 %s20, 64
          %p26 = scmp.gt.s32.totalorder %s22, %s25
        $region12: #{custom-call.2} parent=8 // loop_header_branch
          %28 = sbr.rel (%p26) target = $region16
        $region13: #{custom-call.2} parent=8 // loop_body
          %29 = vst [vmem:[%s23] sm:$0xff] %v24
          %v30 = vld [vmem:[%s22 + $0x8] sm:$0xff]
          %31 = vst [vmem:[%s23 + $0x8] sm:$0xff] %v30
          %v32 = vld [vmem:[%s22 + $0x10] sm:$0xff]
          %33 = vst [vmem:[%s23 + $0x10] sm:$0xff] %v32
          %v34 = vld [vmem:[%s22 + $0x18] sm:$0xff]
          %35 = vst [vmem:[%s23 + $0x18] sm:$0xff] %v34
          %v36 = vld [vmem:[%s22 + $0x20] sm:$0xff]
          %37 = vst [vmem:[%s23 + $0x20] sm:$0xff] %v36
          %v38 = vld [vmem:[%s22 + $0x28] sm:$0xff]
          %39 = vst [vmem:[%s23 + $0x28] sm:$0xff] %v38
          %v40 = vld [vmem:[%s22 + $0x30] sm:$0xff]
          %41 = vst [vmem:[%s23 + $0x30] sm:$0xff] %v40
          %v42 = vld [vmem:[%s22 + $0x38] sm:$0xff]
          %43 = vst [vmem:[%s23 + $0x38] sm:$0xff] %v42
        $region14: #{custom-call.2} parent=8 // loop_footer
          %s44 = scalar_lea.vmem %s22, 64
          %s45 = scalar_lea.vmem %s23, 64
          %v46 = vld [vmem:[%s22 + $0x40] sm:$0xff]
        $region15: #{custom-call.2} parent=8 // loop_footer_branch
          %47 = sbr.rel target = $region11
        $region16: #{custom-call.2} parent=8 // loop_exit
          _
        // While loop
        $region17: #{custom-call.2} parent=8 // loop_pre_header
          _
        $region18: #{custom-call.2} parent=8 // loop_header
          %s48 = sphi %s22, %s56
          %s49 = sphi %s23, %s57
          %v50 = vphi %v24, %v50
          %p51 = scmp.gt.s32.totalorder %s48, %s20
        $region19: #{custom-call.2} parent=8 // loop_header_branch
          %53 = sbr.rel (%p51) target = $region23
        $region20: #{custom-call.2} parent=8 // loop_body
          %v54 = vld [vmem:[%s48] sm:$0xff]
          %55 = vst [vmem:[%s49] sm:$0xff] %v54
        $region21: #{custom-call.2} parent=8 // loop_footer
          %s56 = scalar_lea.vmem %s48, 8
          %s57 = scalar_lea.vmem %s49, 8
        $region22: #{custom-call.2} parent=8 // loop_footer_branch
          %58 = sbr.rel target = $region18
        $region23: #{custom-call.2} parent=8 // loop_exit
          _
      $region9: #{custom-call.2} parent=4 // pred_fallthru
        _
      %s60 = ssub.s32 16, 1
      %s61 = smul.u32 0, 8
      %s62 = scalar_lea.vmem [#allocation1], %s61
      %s63 = smul.u32 0, 8
      %s64 = scalar_lea.vmem %s0, %s63
      %v65 = vld [vmem:[%s64] sm:%s60]
      %66 = vst [vmem:[%s62] sm:%s60] %v65
    $region5: #{custom-call.2} parent=1 // pred_fallthru
      _
    // Predicated region
    $region24: #{custom-call.2} parent=1 // pred_check
      _
    $region25: #{custom-call.2} parent=1 // pred_check_branch
      %68 = sbr.rel (0) target = $region27
    $region26: #{custom-call.2} parent=1 // pred_region
      %p70 = scmp.gt.s32.totalorder 0, 0
      // Predicated region
      $region28: #{custom-call.2} parent=26 // pred_check
        %p71 = pneg %p70
      $region29: #{custom-call.2} parent=26 // pred_check_branch
        %73 = sbr.rel (%p71) target = $region31
      $region30: #{custom-call.2} parent=26 // pred_region
        %s74 = ssub.s32 0, 1
        %s75 = smul.u32 %s74, 8
        %s76 = scalar_lea.vmem %s1, %s75
        %v77 = vld [vmem:[%s1] sm:$0xff]
        // While loop
        $region32: #{custom-call.2} parent=30 // loop_pre_header
          _
        $region33: #{custom-call.2} parent=30 // loop_header
          %s78 = sphi %s1, %s100
          %s79 = sphi [#allocation3], %s101
          %v80 = vphi %v77, %v102
          %s81 = ssub.s32 %s76, 64
          %p82 = scmp.gt.s32.totalorder %s78, %s81
        $region34: #{custom-call.2} parent=30 // loop_header_branch
          %84 = sbr.rel (%p82) target = $region38
        $region35: #{custom-call.2} parent=30 // loop_body
          %85 = vst [vmem:[%s79] sm:$0xff] %v80
          %v86 = vld [vmem:[%s78 + $0x8] sm:$0xff]
          %87 = vst [vmem:[%s79 + $0x8] sm:$0xff] %v86
          %v88 = vld [vmem:[%s78 + $0x10] sm:$0xff]
          %89 = vst [vmem:[%s79 + $0x10] sm:$0xff] %v88
          %v90 = vld [vmem:[%s78 + $0x18] sm:$0xff]
          %91 = vst [vmem:[%s79 + $0x18] sm:$0xff] %v90
          %v92 = vld [vmem:[%s78 + $0x20] sm:$0xff]
          %93 = vst [vmem:[%s79 + $0x20] sm:$0xff] %v92
          %v94 = vld [vmem:[%s78 + $0x28] sm:$0xff]
          %95 = vst [vmem:[%s79 + $0x28] sm:$0xff] %v94
          %v96 = vld [vmem:[%s78 + $0x30] sm:$0xff]
          %97 = vst [vmem:[%s79 + $0x30] sm:$0xff] %v96
          %v98 = vld [vmem:[%s78 + $0x38] sm:$0xff]
          %99 = vst [vmem:[%s79 + $0x38] sm:$0xff] %v98
        $region36: #{custom-call.2} parent=30 // loop_footer
          %s100 = scalar_lea.vmem %s78, 64
          %s101 = scalar_lea.vmem %s79, 64
          %v102 = vld [vmem:[%s78 + $0x40] sm:$0xff]
        $region37: #{custom-call.2} parent=30 // loop_footer_branch
          %103 = sbr.rel target = $region33
        $region38: #{custom-call.2} parent=30 // loop_exit
          _
        // While loop
        $region39: #{custom-call.2} parent=30 // loop_pre_header
          _
        $region40: #{custom-call.2} parent=30 // loop_header
          %s104 = sphi %s78, %s112
          %s105 = sphi %s79, %s113
          %v106 = vphi %v80, %v106
          %p107 = scmp.gt.s32.totalorder %s104, %s76
        $region41: #{custom-call.2} parent=30 // loop_header_branch
          %109 = sbr.rel (%p107) target = $region45
        $region42: #{custom-call.2} parent=30 // loop_body
          %v110 = vld [vmem:[%s104] sm:$0xff]
          %111 = vst [vmem:[%s105] sm:$0xff] %v110
        $region43: #{custom-call.2} parent=30 // loop_footer
          %s112 = scalar_lea.vmem %s104, 8
          %s113 = scalar_lea.vmem %s105, 8
        $region44: #{custom-call.2} parent=30 // loop_footer_branch
          %114 = sbr.rel target = $region40
        $region45: #{custom-call.2} parent=30 // loop_exit
          _
      $region31: #{custom-call.2} parent=26 // pred_fallthru
        _
      %s116 = ssub.s32 16, 1
      %s117 = smul.u32 0, 8
      %s118 = scalar_lea.vmem [#allocation3], %s117
      %s119 = smul.u32 0, 8
      %s120 = scalar_lea.vmem %s1, %s119
      %v121 = vld [vmem:[%s120] sm:%s116]
      %122 = vst [vmem:[%s118] sm:%s116] %v121
    $region27: #{custom-call.2} parent=1 // pred_fallthru
      _
    // Predicated region
    $region46: #{custom-call.2} parent=1 // pred_check
      _
    $region47: #{custom-call.2} parent=1 // pred_check_branch
      %124 = sbr.rel (0) target = $region49
    $region48: #{custom-call.2} parent=1 // pred_region
      %p126 = scmp.gt.s32.totalorder 0, 0
      // Predicated region
      $region50: #{custom-call.2} parent=48 // pred_check
        %p127 = pneg %p126
      $region51: #{custom-call.2} parent=48 // pred_check_branch
        %129 = sbr.rel (%p127) target = $region53
      $region52: #{custom-call.2} parent=48 // pred_region
        %s130 = ssub.s32 0, 1
        %s131 = smul.u32 %s130, 8
        %s132 = scalar_lea.vmem %s2, %s131
        %v133 = vld [vmem:[%s2] sm:$0xff]
        // While loop
        $region54: #{custom-call.2} parent=52 // loop_pre_header
          _
        $region55: #{custom-call.2} parent=52 // loop_header
          %s134 = sphi %s2, %s156
          %s135 = sphi [#allocation5], %s157
          %v136 = vphi %v133, %v158
          %s137 = ssub.s32 %s132, 64
          %p138 = scmp.gt.s32.totalorder %s134, %s137
        $region56: #{custom-call.2} parent=52 // loop_header_branch
          %140 = sbr.rel (%p138) target = $region60
        $region57: #{custom-call.2} parent=52 // loop_body
          %141 = vst [vmem:[%s135] sm:$0xff] %v136
          %v142 = vld [vmem:[%s134 + $0x8] sm:$0xff]
          %143 = vst [vmem:[%s135 + $0x8] sm:$0xff] %v142
          %v144 = vld [vmem:[%s134 + $0x10] sm:$0xff]
          %145 = vst [vmem:[%s135 + $0x10] sm:$0xff] %v144
          %v146 = vld [vmem:[%s134 + $0x18] sm:$0xff]
          %147 = vst [vmem:[%s135 + $0x18] sm:$0xff] %v146
          %v148 = vld [vmem:[%s134 + $0x20] sm:$0xff]
          %149 = vst [vmem:[%s135 + $0x20] sm:$0xff] %v148
          %v150 = vld [vmem:[%s134 + $0x28] sm:$0xff]
          %151 = vst [vmem:[%s135 + $0x28] sm:$0xff] %v150
          %v152 = vld [vmem:[%s134 + $0x30] sm:$0xff]
          %153 = vst [vmem:[%s135 + $0x30] sm:$0xff] %v152
          %v154 = vld [vmem:[%s134 + $0x38] sm:$0xff]
          %155 = vst [vmem:[%s135 + $0x38] sm:$0xff] %v154
        $region58: #{custom-call.2} parent=52 // loop_footer
          %s156 = scalar_lea.vmem %s134, 64
          %s157 = scalar_lea.vmem %s135, 64
          %v158 = vld [vmem:[%s134 + $0x40] sm:$0xff]
        $region59: #{custom-call.2} parent=52 // loop_footer_branch
          %159 = sbr.rel target = $region55
        $region60: #{custom-call.2} parent=52 // loop_exit
          _
        // While loop
        $region61: #{custom-call.2} parent=52 // loop_pre_header
          _
        $region62: #{custom-call.2} parent=52 // loop_header
          %s160 = sphi %s134, %s168
          %s161 = sphi %s135, %s169
          %v162 = vphi %v136, %v162
          %p163 = scmp.gt.s32.totalorder %s160, %s132
        $region63: #{custom-call.2} parent=52 // loop_header_branch
          %165 = sbr.rel (%p163) target = $region67
        $region64: #{custom-call.2} parent=52 // loop_body
          %v166 = vld [vmem:[%s160] sm:$0xff]
          %167 = vst [vmem:[%s161] sm:$0xff] %v166
        $region65: #{custom-call.2} parent=52 // loop_footer
          %s168 = scalar_lea.vmem %s160, 8
          %s169 = scalar_lea.vmem %s161, 8
        $region66: #{custom-call.2} parent=52 // loop_footer_branch
          %170 = sbr.rel target = $region62
        $region67: #{custom-call.2} parent=52 // loop_exit
          _
      $region53: #{custom-call.2} parent=48 // pred_fallthru
        _
      %s172 = ssub.s32 16, 1
      %s173 = smul.u32 0, 8
      %s174 = scalar_lea.vmem [#allocation5], %s173
      %s175 = smul.u32 0, 8
      %s176 = scalar_lea.vmem %s2, %s175
      %v177 = vld [vmem:[%s176] sm:%s172]
      %178 = vst [vmem:[%s174] sm:%s172] %v177
    $region49: #{custom-call.2} parent=1 // pred_fallthru
      _
    // Predicated region
    $region68: #{custom-call.2} parent=1 // pred_check
      _
    $region69: #{custom-call.2} parent=1 // pred_check_branch
      %180 = sbr.rel (0) target = $region71
    $region70: #{custom-call.2} parent=1 // pred_region
      %p182 = scmp.gt.s32.totalorder 0, 0
      // Predicated region
      $region72: #{custom-call.2} parent=70 // pred_check
        %p183 = pneg %p182
      $region73: #{custom-call.2} parent=70 // pred_check_branch
        %185 = sbr.rel (%p183) target = $region75
      $region74: #{custom-call.2} parent=70 // pred_region
        %s186 = ssub.s32 0, 1
        %s187 = smul.u32 %s186, 8
        %s188 = scalar_lea.vmem %s3, %s187
        %v189 = vld [vmem:[%s3] sm:$0xff]
        // While loop
        $region76: #{custom-call.2} parent=74 // loop_pre_header
          _
        $region77: #{custom-call.2} parent=74 // loop_header
          %s190 = sphi %s3, %s212
          %s191 = sphi [#allocation7], %s213
          %v192 = vphi %v189, %v214
          %s193 = ssub.s32 %s188, 64
          %p194 = scmp.gt.s32.totalorder %s190, %s193
        $region78: #{custom-call.2} parent=74 // loop_header_branch
          %196 = sbr.rel (%p194) target = $region82
        $region79: #{custom-call.2} parent=74 // loop_body
          %197 = vst [vmem:[%s191] sm:$0xff] %v192
          %v198 = vld [vmem:[%s190 + $0x8] sm:$0xff]
          %199 = vst [vmem:[%s191 + $0x8] sm:$0xff] %v198
          %v200 = vld [vmem:[%s190 + $0x10] sm:$0xff]
          %201 = vst [vmem:[%s191 + $0x10] sm:$0xff] %v200
          %v202 = vld [vmem:[%s190 + $0x18] sm:$0xff]
          %203 = vst [vmem:[%s191 + $0x18] sm:$0xff] %v202
          %v204 = vld [vmem:[%s190 + $0x20] sm:$0xff]
          %205 = vst [vmem:[%s191 + $0x20] sm:$0xff] %v204
          %v206 = vld [vmem:[%s190 + $0x28] sm:$0xff]
          %207 = vst [vmem:[%s191 + $0x28] sm:$0xff] %v206
          %v208 = vld [vmem:[%s190 + $0x30] sm:$0xff]
          %209 = vst [vmem:[%s191 + $0x30] sm:$0xff] %v208
          %v210 = vld [vmem:[%s190 + $0x38] sm:$0xff]
          %211 = vst [vmem:[%s191 + $0x38] sm:$0xff] %v210
        $region80: #{custom-call.2} parent=74 // loop_footer
          %s212 = scalar_lea.vmem %s190, 64
          %s213 = scalar_lea.vmem %s191, 64
          %v214 = vld [vmem:[%s190 + $0x40] sm:$0xff]
        $region81: #{custom-call.2} parent=74 // loop_footer_branch
          %215 = sbr.rel target = $region77
        $region82: #{custom-call.2} parent=74 // loop_exit
          _
        // While loop
        $region83: #{custom-call.2} parent=74 // loop_pre_header
          _
        $region84: #{custom-call.2} parent=74 // loop_header
          %s216 = sphi %s190, %s224
          %s217 = sphi %s191, %s225
          %v218 = vphi %v192, %v218
          %p219 = scmp.gt.s32.totalorder %s216, %s188
        $region85: #{custom-call.2} parent=74 // loop_header_branch
          %221 = sbr.rel (%p219) target = $region89
        $region86: #{custom-call.2} parent=74 // loop_body
          %v222 = vld [vmem:[%s216] sm:$0xff]
          %223 = vst [vmem:[%s217] sm:$0xff] %v222
        $region87: #{custom-call.2} parent=74 // loop_footer
          %s224 = scalar_lea.vmem %s216, 8
          %s225 = scalar_lea.vmem %s217, 8
        $region88: #{custom-call.2} parent=74 // loop_footer_branch
          %226 = sbr.rel target = $region84
        $region89: #{custom-call.2} parent=74 // loop_exit
          _
      $region75: #{custom-call.2} parent=70 // pred_fallthru
        _
      %s228 = ssub.s32 16, 1
      %s229 = smul.u32 0, 8
      %s230 = scalar_lea.vmem [#allocation7], %s229
      %s231 = smul.u32 0, 8
      %s232 = scalar_lea.vmem %s3, %s231
      %v233 = vld [vmem:[%s232] sm:%s228]
      %234 = vst [vmem:[%s230] sm:%s228] %v233
    $region71: #{custom-call.2} parent=1 // pred_fallthru
      _
    %s236 = ssub.s32 16, 1
    %v237 = vld [vmem:[#allocation1] sm:%s236]
    %238 = vst [vmem:[#allocation0] sm:%s236] %v237
    %s240 = ssub.s32 16, 1
    %v241 = vld [vmem:[#allocation3] sm:%s240]
    %242 = vst [vmem:[#allocation2] sm:%s240] %v241
    %s244 = ssub.s32 16, 1
    %v245 = vld [vmem:[#allocation5] sm:%s244]
    %246 = vst [vmem:[#allocation4] sm:%s244] %v245
    %s248 = ssub.s32 16, 1
    %v249 = vld [vmem:[#allocation7] sm:%s248]
    %250 = vst [vmem:[#allocation6] sm:%s248] %v249
    %s251 = smov [#allocation20]
    %v252 = vld [vmem:[#allocation0] sm:$0xff]
    %253 = vst [vmem:[%s251] sm:$0xff] %v252
    %s254 = smov [#allocation21]
    %v255 = vld [vmem:[#allocation2] sm:$0xff]
    %256 = vst [vmem:[%s254] sm:$0xff] %v255
    %s257 = smov [#allocation22]
    %v258 = vld [vmem:[#allocation4] sm:$0xff]
    %259 = vst [vmem:[%s257] sm:$0xff] %v258
    %s260 = smov [#allocation23]
    %v261 = vld [vmem:[#allocation6] sm:$0xff]
    %262 = vst [vmem:[%s260] sm:$0xff] %v261
    %263 = vst [vmem:[#allocation12] sm:$0xff] 0.0
    %264 = vst [vmem:[#allocation14] sm:$0xff] 0.0
    %265 = vst [vmem:[#allocation16] sm:$0xff] 0.0
    %266 = vst [vmem:[#allocation18] sm:$0xff] 0.0
    %s267 = smov [#allocation12]
    %v268 = vlaneseq
    %v269 = vand.u32 %v268, 127
    %v270 = vmov %v269
    %v271 = vlaneseq
    %v272 = vshrl.u32 %v271, 7
    %v273 = vmov %v272
    %v274 = vld [vmem:[%s267] sm:$0xf]
    %vm277 = vcmp.eq.s32.totalorder %v273, %v270
    %v278 = vsel %vm277, 1.0, %v274
    %279 = vst [vmem:[%s267] sm:$0xf] %v278
    %s280 = smov [#allocation18]
    %v281 = vlaneseq
    %v282 = vand.u32 %v281, 127
    %v283 = vmov %v282
    %v284 = vlaneseq
    %v285 = vshrl.u32 %v284, 7
    %v286 = vmov %v285
    %v287 = vld [vmem:[%s280] sm:$0xf]
    %vm290 = vcmp.eq.s32.totalorder %v286, %v283
    %v291 = vsel %vm290, 1.0, %v287
    %292 = vst [vmem:[%s280] sm:$0xf] %v291
    // While loop
    $region90: #{custom-call.2} parent=1 // loop_pre_header
      _
    $region91: #{custom-call.2} parent=1 // loop_header
      %s294 = sphi 0, %s876
      %v295 = vlaneseq
      %v296 = vand.u32 %v295, 127
      %v297 = vmov %v296
      %v298 = vlaneseq
      %v299 = vshrl.u32 %v298, 7
      %v300 = vmov %v299
      %s301 = smov [#allocation20]
      %v302 = vlaneseq
      %v303 = vand.u32 %v302, 127
      %vm304 = vcmp.ge.s32.totalorder %v303, 0
      %vm305 = vcmp.lt.s32.totalorder %v303, 4
      %vm306 = vmand %vm304, %vm305
      %v307 = vld [vmem:[%s301] sm:$0xf]
      %v308 = vsel %vm306, %v307, 0.0
      %v309 = vmul.f32 %v308, %v308
      %vm312 = vcmp.eq.s32.totalorder %v300, %v297
      %v313 = vsel %vm312, 0.0, %v309
      %v314 = vlaneseq
      %v315 = vand.u32 %v314, 127
      %v316 = vmov %v315
      %v317 = vlaneseq
      %v318 = vshrl.u32 %v317, 7
      %v319 = vmov %v318
      %s320 = smov [#allocation21]
      %v321 = vlaneseq
      %v322 = vand.u32 %v321, 127
      %vm323 = vcmp.ge.s32.totalorder %v322, 0
      %vm324 = vcmp.lt.s32.totalorder %v322, 4
      %vm325 = vmand %vm323, %vm324
      %v326 = vld [vmem:[%s320] sm:$0xf]
      %v327 = vsel %vm325, %v326, 0.0
      %v328 = vmul.f32 %v327, %v327
      %v329 = vadd.f32 %v313, %v328
      %v330 = vadd.f32 %v309, %v328
      %v331 = vlaneseq
      %v332 = vand.u32 %v331, 127
      %v333 = vmov %v332
      %v334 = vlaneseq
      %v335 = vshrl.u32 %v334, 7
      %v336 = vmov %v335
      %s337 = smov [#allocation22]
      %v338 = vlaneseq
      %v339 = vand.u32 %v338, 127
      %vm340 = vcmp.ge.s32.totalorder %v339, 0
      %vm341 = vcmp.lt.s32.totalorder %v339, 4
      %vm342 = vmand %vm340, %vm341
      %v343 = vld [vmem:[%s337] sm:$0xf]
      %v344 = vsel %vm342, %v343, 0.0
      %v345 = vmul.f32 %v344, %v344
      %v346 = vadd.f32 %v329, %v345
      %v347 = vadd.f32 %v330, %v345
      %v348 = vlaneseq
      %v349 = vand.u32 %v348, 127
      %v350 = vmov %v349
      %v351 = vlaneseq
      %v352 = vshrl.u32 %v351, 7
      %v353 = vmov %v352
      %s354 = smov [#allocation23]
      %v355 = vlaneseq
      %v356 = vand.u32 %v355, 127
      %vm357 = vcmp.ge.s32.totalorder %v356, 0
      %vm358 = vcmp.lt.s32.totalorder %v356, 4
      %vm359 = vmand %vm357, %vm358
      %v360 = vld [vmem:[%s354] sm:$0xf]
      %v361 = vsel %vm359, %v360, 0.0
      %v362 = vmul.f32 %v361, %v361
      %vm365 = vcmp.eq.s32.totalorder %v353, %v350
      %v366 = vsel %vm365, 0.0, %v362
      %v367 = vadd.f32 %v346, %v366
      %v368 = vadd.f32 %v347, %v362
      %369 = vadd.xlane.f32.xlu0 %v368
      %v370 = vpop.xlane.xlu0 %369
      %v371 = vrot.slane %v370, 4
      %v372 = vadd.f32 %v370, %v371
      %v373 = vrot.slane %v372, 2
      %v374 = vadd.f32 %v372, %v373
      %v375 = vrot.slane %v374, 1
      %v376 = vadd.f32 %v374, %v375
      %377 = vadd.xlane.f32.xlu0 %v367
      %v378 = vpop.xlane.xlu0 %377
      %v379 = vrot.slane %v378, 4
      %v380 = vadd.f32 %v378, %v379
      %v381 = vrot.slane %v380, 2
      %v382 = vadd.f32 %v380, %v381
      %v383 = vrot.slane %v382, 1
      %v384 = vadd.f32 %v382, %v383
      %s385 = vtos %v384
      %s386 = vtos %v376
      %s387 = smul.f32 1e-10, %s386
      %p388 = scmp.le.f32.partialorder %s385, %s387
      %p389 = scmp.ge.s32.totalorder %s294, 15
      %p390 = por %p388, %p389
    $region92: #{custom-call.2} parent=1 // loop_header_branch
      %878 = sbr.rel (%p390) target = $region96
    $region93: #{custom-call.2} parent=1 // loop_body
      loop: start=0, step=1, limit=7
      $region97: #{custom-call.2} parent=93 // loop_pre_header
        _
      $region98: #{custom-call.2} parent=93 // loop_header
        %s392 = sphi 0, %s396
        %p393 = scmp.ge.s32.totalorder %s392, 7
      $region99: #{custom-call.2} parent=93 // loop_header_branch
        %395 = sbr.rel (%p393) target = $region103
      $region100: #{custom-call.2} parent=93 // loop_body
        #allocation24 [shape = 'f32[1024]{0}', space=vmem, size = 0x1000, scoped, tag = 'a_tl_diag vmem']
        #allocation25 [shape = 'f32[1024]{0}', space=vmem, size = 0x1000, scoped, tag = 'a_tr_diag vmem']
        #allocation26 [shape = 'f32[1024]{0}', space=vmem, size = 0x1000, scoped, tag = 'a_br_diag vmem']
        #allocation27 [shape = 'f32[1024]{0}', space=vmem, size = 0x1000, scoped, tag = 'rt1 vmem']
        #allocation28 [shape = 'f32[1024]{0}', space=vmem, size = 0x1000, scoped, tag = 'rt2 vmem']
        #allocation29 [shape = 'f32[1024]{0}', space=vmem, size = 0x1000, scoped, tag = 'c vmem']
        #allocation30 [shape = 'f32[1024]{0}', space=vmem, size = 0x1000, scoped, tag = 's vmem']
        #allocation31 [shape = 'f32[4096]{0}', space=vmem, size = 0x4000, scoped, tag = 'c broadcast']
        #allocation32 [shape = 'f32[4096]{0}', space=vmem, size = 0x4000, scoped, tag = 's broadcast']
        %s397 = smov [#allocation20]
        %s398 = smov [#allocation24]
        %v399 = vlaneseq
        %v400 = vand.u32 %v399, 127
        %v401 = vmov %v400
        %v402 = vlaneseq
        %v403 = vshrl.u32 %v402, 7
        %v404 = vmov %v403
        %v405 = vld [vmem:[%s397] sm:$0xf]
        %vm408 = vcmp.eq.s32.totalorder %v404, %v401
        %v409 = vsel %vm408, %v405, 0.0
        %v410 = vrot.slane %v409, 4
        %v411 = vadd.f32 %v409, %v410
        %v412 = vrot.slane %v411, 2
        %v413 = vadd.f32 %v411, %v412
        %v414 = vrot.slane %v413, 1
        %v415 = vadd.f32 %v413, %v414
        %416 = vst [vmem:[%s398] sm:$0x1] %v415
        %s417 = smov [#allocation21]
        %s418 = smov [#allocation25]
        %v419 = vlaneseq
        %v420 = vand.u32 %v419, 127
        %v421 = vmov %v420
        %v422 = vlaneseq
        %v423 = vshrl.u32 %v422, 7
        %v424 = vmov %v423
        %v425 = vld [vmem:[%s417] sm:$0xf]
        %vm428 = vcmp.eq.s32.totalorder %v424, %v421
        %v429 = vsel %vm428, %v425, 0.0
        %v430 = vrot.slane %v429, 4
        %v431 = vadd.f32 %v429, %v430
        %v432 = vrot.slane %v431, 2
        %v433 = vadd.f32 %v431, %v432
        %v434 = vrot.slane %v433, 1
        %v435 = vadd.f32 %v433, %v434
        %436 = vst [vmem:[%s418] sm:$0x1] %v435
        %s437 = smov [#allocation23]
        %s438 = smov [#allocation26]
        %v439 = vlaneseq
        %v440 = vand.u32 %v439, 127
        %v441 = vmov %v440
        %v442 = vlaneseq
        %v443 = vshrl.u32 %v442, 7
        %v444 = vmov %v443
        %v445 = vld [vmem:[%s437] sm:$0xf]
        %vm448 = vcmp.eq.s32.totalorder %v444, %v441
        %v449 = vsel %vm448, %v445, 0.0
        %v450 = vrot.slane %v449, 4
        %v451 = vadd.f32 %v449, %v450
        %v452 = vrot.slane %v451, 2
        %v453 = vadd.f32 %v451, %v452
        %v454 = vrot.slane %v453, 1
        %v455 = vadd.f32 %v453, %v454
        %456 = vst [vmem:[%s438] sm:$0x1] %v455
        %s457 = smov [#allocation29]
        %s458 = smov [#allocation30]
        %s459 = smov [#allocation24]
        %v460 = vld [vmem:[%s459] sm:$0xff]
        %s461 = smov [#allocation25]
        %v462 = vld [vmem:[%s461] sm:$0xff]
        %s463 = smov [#allocation26]
        %v464 = vld [vmem:[%s463] sm:$0xff]
        %v465 = vsub.f32 %v464, %v460
        %v466 = vmul.f32 2.0, %v462
        %v467 = vrcp.pop %v466
        %v468 = vmul.f32 %v466, %v467
        %v469 = vsub.f32 1.0, %v468
        %v470 = vmul.f32 %v467, %v469
        %v471 = vadd.f32 %v467, %v470
        %vm472 = vweird.f32 %v466
        %vm473 = vweird.f32 %v467
        %vm474 = vmor %vm472, %vm473
        %v475 = vsel %vm474, %v467, %v471
        %v476 = vand.u32 2147483647, %v466
        %vm477 = vcmp.eq.f32.partialorder %v476, 8.507059e+37
        %v478 = vand.u32 %v466, 2147483648
        %v479 = vor.u32 1.1754944e-38, %v478
        %v480 = vsel %vm477, %v479, %v475
        %v481 = vmul.f32 %v465, %v480
        %vm482 = vcmp.ge.f32.partialorder %v481, 0.0
        %v483 = vmul.f32 %v481, %v481
        %v484 = vadd.f32 1.0, %v483
        %v485 = vrsqrt.pop %v484
        %v486 = vmul.f32 %v485, %v484
        %v487 = vmul.f32 %v486, %v485
        %v488 = vmul.f32 0.5, %v487
        %v489 = vsub.f32 1.5, %v488
        %v490 = vmul.f32 %v485, %v489
        %v491 = vmul.f32 %v484, %v490
        %vm492 = vcmp.eq.f32.partialorder %v484, inf
        %v493 = vsel %vm492, %v484, %v491
        %vm494 = vcmp.eq.f32.partialorder %v484, 0.0
        %v495 = vand.u32 %v484, 2147483648
        %v496 = vsel %vm494, %v495, %v493
        %v497 = vxor.u32 %v496, 2147483648
        %v498 = vsel %vm482, %v496, %v497
        %v499 = vadd.f32 %v481, %v498
        %v500 = vrcp.pop %v499
        %v501 = vmul.f32 %v499, %v500
        %v502 = vsub.f32 1.0, %v501
        %v503 = vmul.f32 %v500, %v502
        %v504 = vadd.f32 %v500, %v503
        %vm505 = vweird.f32 %v499
        %vm506 = vweird.f32 %v500
        %vm507 = vmor %vm505, %vm506
        %v508 = vsel %vm507, %v500, %v504
        %v509 = vand.u32 2147483647, %v499
        %vm510 = vcmp.eq.f32.partialorder %v509, 8.507059e+37
        %v511 = vand.u32 %v499, 2147483648
        %v512 = vor.u32 1.1754944e-38, %v511
        %v513 = vsel %vm510, %v512, %v508
        %v514 = vand.u32 2147483647, %v460
        %v515 = vand.u32 2147483647, %v462
        %v516 = vand.u32 2147483647, %v464
        %v517 = vmin.f32 %v514, %v516
        %v518 = vmul.f32 1.1920929e-08, %v517
        %vm519 = vcmp.le.f32.partialorder %v515, %v518
        %v520 = vsel %vm519, 0.0, %v513
        %v521 = vmul.f32 %v520, %v520
        %v522 = vadd.f32 1.0, %v521
        %v523 = vrsqrt.pop %v522
        %v524 = vmul.f32 %v523, %v522
        %v525 = vmul.f32 %v524, %v523
        %v526 = vmul.f32 0.5, %v525
        %v527 = vsub.f32 1.5, %v526
        %v528 = vmul.f32 %v523, %v527
        %vm529 = vweird.f32 %v522
        %vm530 = vweird.f32 %v523
        %vm531 = vmor %vm529, %vm530
        %v532 = vsel %vm531, %v523, %v528
        %v533 = vmul.f32 %v520, %v532
        %v534 = vmul.f32 %v520, %v462
        %v535 = vsub.f32 %v460, %v534
        %v536 = vmul.f32 %v520, %v462
        %v537 = vadd.f32 %v464, %v536
        %s538 = smov [#allocation27]
        %539 = vst [vmem:[%s538] sm:$0xff] %v535
        %s540 = smov [#allocation28]
        %541 = vst [vmem:[%s540] sm:$0xff] %v537
        %s542 = smov %s457
        %543 = vst [vmem:[%s542] sm:$0xff] %v532
        %s544 = smov %s458
        %545 = vst [vmem:[%s544] sm:$0xff] %v533
        %s546 = smov [#allocation29]
        %v547 = vld [vmem:[%s546] ss:$0 sm:$0xff]
        %v548 = vlaneseq
        %v549 = vand.u32 %v548, 127
        %v550 = vmov %v549
        %v551 = vlaneseq
        %v552 = vshrl.u32 %v551, 7
        %v553 = vmov %v552
        %vm555 = vcmp.eq.s32.totalorder %v553, %v550
        %v556 = vsel %vm555, %v547, 0.0
        %557 = vadd.xlane.f32.xlu0 %v556
        %v558 = vpop.xlane.xlu0 %557
        %s559 = smov [#allocation31]
        %560 = vst [vmem:[%s559] sm:$0xff] %v558
        %s561 = smov [#allocation30]
        %v562 = vld [vmem:[%s561] ss:$0 sm:$0xff]
        %v563 = vlaneseq
        %v564 = vand.u32 %v563, 127
        %v565 = vmov %v564
        %v566 = vlaneseq
        %v567 = vshrl.u32 %v566, 7
        %v568 = vmov %v567
        %vm570 = vcmp.eq.s32.totalorder %v568, %v565
        %v571 = vsel %vm570, %v562, 0.0
        %572 = vadd.xlane.f32.xlu0 %v571
        %v573 = vpop.xlane.xlu0 %572
        %s574 = smov [#allocation32]
        %575 = vst [vmem:[%s574] sm:$0xff] %v573
        %s576 = smov [#allocation31]
        %v577 = vld [vmem:[%s576] sm:$0xff]
        %s578 = smov [#allocation32]
        %v579 = vld [vmem:[%s578] sm:$0xff]
        %s580 = smov [#allocation20]
        %s581 = smov [#allocation21]
        %s582 = smov [#allocation22]
        %s583 = smov [#allocation23]
        %v584 = vld [vmem:[%s580] sm:$0xf]
        %v585 = vld [vmem:[%s581] sm:$0xf]
        %v586 = vld [vmem:[%s582] sm:$0xf]
        %v587 = vld [vmem:[%s583] sm:$0xf]
        %v588 = vmul.f32 %v577, %v584
        %v589 = vmul.f32 %v579, %v586
        %v590 = vsub.f32 %v588, %v589
        %v591 = vmul.f32 %v577, %v585
        %v592 = vmul.f32 %v579, %v587
        %v593 = vsub.f32 %v591, %v592
        %v594 = vmul.f32 %v579, %v584
        %v595 = vmul.f32 %v577, %v586
        %v596 = vadd.f32 %v594, %v595
        %v597 = vmul.f32 %v579, %v585
        %v598 = vmul.f32 %v577, %v587
        %v599 = vadd.f32 %v597, %v598
        %600 = vst [vmem:[%s580] sm:$0xf] %v590
        %601 = vst [vmem:[%s581] sm:$0xf] %v593
        %602 = vst [vmem:[%s582] sm:$0xf] %v596
        %603 = vst [vmem:[%s583] sm:$0xf] %v599
        %s604 = smov [#allocation29]
        %v605 = vld [vmem:[%s604] ss:$0 sm:$0xff]
        %s606 = smov [#allocation30]
        %v607 = vld [vmem:[%s606] ss:$0 sm:$0xff]
        %s608 = smov [#allocation20]
        %s609 = smov [#allocation21]
        %s610 = smov [#allocation22]
        %s611 = smov [#allocation23]
        %v612 = vld [vmem:[%s608] sm:$0xf]
        %v613 = vld [vmem:[%s609] sm:$0xf]
        %v614 = vld [vmem:[%s610] sm:$0xf]
        %v615 = vld [vmem:[%s611] sm:$0xf]
        %v616 = vmul.f32 %v605, %v612
        %v617 = vmul.f32 %v607, %v613
        %v618 = vsub.f32 %v616, %v617
        %v619 = vmul.f32 %v607, %v612
        %v620 = vmul.f32 %v605, %v613
        %v621 = vadd.f32 %v619, %v620
        %v622 = vmul.f32 %v605, %v614
        %v623 = vmul.f32 %v607, %v615
        %v624 = vsub.f32 %v622, %v623
        %v625 = vmul.f32 %v607, %v614
        %v626 = vmul.f32 %v605, %v615
        %v627 = vadd.f32 %v625, %v626
        %628 = vst [vmem:[%s608] sm:$0xf] %v618
        %629 = vst [vmem:[%s609] sm:$0xf] %v621
        %630 = vst [vmem:[%s610] sm:$0xf] %v624
        %631 = vst [vmem:[%s611] sm:$0xf] %v627
        %s632 = smov [#allocation20]
        %s633 = smov [#allocation27]
        %v634 = vlaneseq
        %v635 = vand.u32 %v634, 127
        %v636 = vmov %v635
        %v637 = vlaneseq
        %v638 = vshrl.u32 %v637, 7
        %v639 = vmov %v638
        %v640 = vld [vmem:[%s633] ss:$0 sm:$0xff]
        %v641 = vld [vmem:[%s632] sm:$0xf]
        %vm644 = vcmp.eq.s32.totalorder %v639, %v636
        %v645 = vsel %vm644, %v640, %v641
        %646 = vst [vmem:[%s632] sm:$0xf] %v645
        %s647 = smov [#allocation21]
        %v648 = vlaneseq
        %v649 = vand.u32 %v648, 127
        %v650 = vmov %v649
        %v651 = vlaneseq
        %v652 = vshrl.u32 %v651, 7
        %v653 = vmov %v652
        %v654 = vld [vmem:[%s647] sm:$0xf]
        %vm657 = vcmp.eq.s32.totalorder %v653, %v650
        %v658 = vsel %vm657, 0.0, %v654
        %659 = vst [vmem:[%s647] sm:$0xf] %v658
        %s660 = smov [#allocation22]
        %v661 = vlaneseq
        %v662 = vand.u32 %v661, 127
        %v663 = vmov %v662
        %v664 = vlaneseq
        %v665 = vshrl.u32 %v664, 7
        %v666 = vmov %v665
        %v667 = vld [vmem:[%s660] sm:$0xf]
        %vm670 = vcmp.eq.s32.totalorder %v666, %v663
        %v671 = vsel %vm670, 0.0, %v667
        %672 = vst [vmem:[%s660] sm:$0xf] %v671
        %s673 = smov [#allocation23]
        %s674 = smov [#allocation28]
        %v675 = vlaneseq
        %v676 = vand.u32 %v675, 127
        %v677 = vmov %v676
        %v678 = vlaneseq
        %v679 = vshrl.u32 %v678, 7
        %v680 = vmov %v679
        %v681 = vld [vmem:[%s674] ss:$0 sm:$0xff]
        %v682 = vld [vmem:[%s673] sm:$0xf]
        %vm685 = vcmp.eq.s32.totalorder %v680, %v677
        %v686 = vsel %vm685, %v681, %v682
        %687 = vst [vmem:[%s673] sm:$0xf] %v686
        %s688 = smov [#allocation20]
        %s689 = smov [#allocation21]
        %v690 = vld [vmem:[%s689] sm:$0xf]
        %691 = vrot.lane.b32.xlu0 %v690, 1
        %v692 = vpop.permute.xlu0 %691
        %v693 = vld [vmem:[%s688] sm:$0xf]
        %v694 = vld [vmem:[%s688] sm:$0xf]
        %695 = vrot.lane.b32.xlu0 %v694, 1
        %v696 = vpop.permute.xlu0 %695
        %v697 = vlaneseq
        %v698 = vand.u32 %v697, 127
        %vm699 = vcmp.eq.s32.totalorder %v698, 0
        %v700 = vsel %vm699, %v694, %v696
        %v701 = vlaneseq
        %v702 = vand.u32 %v701, 127
        %vm703 = vcmp.eq.s32.totalorder %v702, 1
        %v704 = vsel %vm703, %v692, %v700
        %v705 = vlaneseq
        %v706 = vand.u32 %v705, 127
        %vm707 = vcmp.ge.s32.totalorder %v706, 0
        %vm708 = vcmp.lt.s32.totalorder %v706, 4
        %vm709 = vmand %vm707, %vm708
        %v710 = vsel %vm709, %v704, 0.0
        %v711 = vld [vmem:[%s689] sm:$0xf]
        %712 = vrot.lane.b32.xlu0 %v711, 127
        %v713 = vpop.permute.xlu0 %712
        %v714 = vlaneseq
        %v715 = vand.u32 %v714, 127
        %vm716 = vcmp.eq.s32.totalorder %v715, 3
        %v717 = vsel %vm716, %v693, %v713
        %718 = vst [vmem:[%s688] sm:$0xf] %v710
        %719 = vst [vmem:[%s689] sm:$0xf] %v717
        %s720 = smov [#allocation22]
        %s721 = smov [#allocation23]
        %v722 = vld [vmem:[%s721] sm:$0xf]
        %723 = vrot.lane.b32.xlu0 %v722, 1
        %v724 = vpop.permute.xlu0 %723
        %v725 = vld [vmem:[%s720] sm:$0xf]
        %v726 = vld [vmem:[%s720] sm:$0xf]
        %727 = vrot.lane.b32.xlu0 %v726, 1
        %v728 = vpop.permute.xlu0 %727
        %v729 = vlaneseq
        %v730 = vand.u32 %v729, 127
        %vm731 = vcmp.eq.s32.totalorder %v730, 0
        %v732 = vsel %vm731, %v726, %v728
        %v733 = vlaneseq
        %v734 = vand.u32 %v733, 127
        %vm735 = vcmp.eq.s32.totalorder %v734, 1
        %v736 = vsel %vm735, %v724, %v732
        %v737 = vlaneseq
        %v738 = vand.u32 %v737, 127
        %vm739 = vcmp.ge.s32.totalorder %v738, 0
        %vm740 = vcmp.lt.s32.totalorder %v738, 4
        %vm741 = vmand %vm739, %vm740
        %v742 = vsel %vm741, %v736, 0.0
        %v743 = vld [vmem:[%s721] sm:$0xf]
        %744 = vrot.lane.b32.xlu0 %v743, 127
        %v745 = vpop.permute.xlu0 %744
        %v746 = vlaneseq
        %v747 = vand.u32 %v746, 127
        %vm748 = vcmp.eq.s32.totalorder %v747, 3
        %v749 = vsel %vm748, %v725, %v745
        %750 = vst [vmem:[%s720] sm:$0xf] %v742
        %751 = vst [vmem:[%s721] sm:$0xf] %v749
        %s752 = smov [#allocation20]
        %s753 = smov [#allocation22]
        %v754 = vld [vmem:[%s752] ss:$0 sm:$0xff]
        %s756 = scalar_lea.vmem %s752, 4294967295
        %v757 = vld [vmem:[%s756] sm:$0xe]
        %v758 = vlaneseq
        %v759 = vshrl.u32 %v758, 7
        %vm760 = vcmp.eq.s32.totalorder %v759, 0
        %v761 = vsel %vm760, %v754, %v757
        %s762 = scalar_lea.vmem %s752, 3
        %v763 = vld [vmem:[%s762] ss:$0 sm:$0xff]
        %764 = vst [vmem:[%s752] sm:$0xf] %v761
        %v765 = vld [vmem:[%s753] ss:$0 sm:$0xff]
        %s766 = scalar_lea.vmem %s752, 1
        %767 = vst [vmem:[%s766] sm:$0x1] %v765
        %s768 = scalar_lea.vmem %s753, 1
        %v769 = vld [vmem:[%s768] sm:$0x7]
        %v770 = vlaneseq
        %v771 = vshrl.u32 %v770, 7
        %vm772 = vcmp.eq.s32.totalorder %v771, 3
        %v773 = vsel %vm772, %v763, %v769
        %v774 = vld [vmem:[%s753] ss:$0 sm:$0xff]
        %775 = vst [vmem:[%s753] sm:$0xf] %v773
        %s776 = smov [#allocation21]
        %s777 = smov [#allocation23]
        %v778 = vld [vmem:[%s776] ss:$0 sm:$0xff]
        %s780 = scalar_lea.vmem %s776, 4294967295
        %v781 = vld [vmem:[%s780] sm:$0xe]
        %v782 = vlaneseq
        %v783 = vshrl.u32 %v782, 7
        %vm784 = vcmp.eq.s32.totalorder %v783, 0
        %v785 = vsel %vm784, %v778, %v781
        %s786 = scalar_lea.vmem %s776, 3
        %v787 = vld [vmem:[%s786] ss:$0 sm:$0xff]
        %788 = vst [vmem:[%s776] sm:$0xf] %v785
        %v789 = vld [vmem:[%s777] ss:$0 sm:$0xff]
        %s790 = scalar_lea.vmem %s776, 1
        %791 = vst [vmem:[%s790] sm:$0x1] %v789
        %s792 = scalar_lea.vmem %s777, 1
        %v793 = vld [vmem:[%s792] sm:$0x7]
        %v794 = vlaneseq
        %v795 = vshrl.u32 %v794, 7
        %vm796 = vcmp.eq.s32.totalorder %v795, 3
        %v797 = vsel %vm796, %v787, %v793
        %v798 = vld [vmem:[%s777] ss:$0 sm:$0xff]
        %799 = vst [vmem:[%s777] sm:$0xf] %v797
        %s800 = smov [#allocation31]
        %v801 = vld [vmem:[%s800] sm:$0xff]
        %s802 = smov [#allocation32]
        %v803 = vld [vmem:[%s802] sm:$0xff]
        %s804 = smov [#allocation12]
        %s805 = smov [#allocation14]
        %s806 = smov [#allocation16]
        %s807 = smov [#allocation18]
        %v808 = vld [vmem:[%s804] sm:$0xf]
        %v809 = vld [vmem:[%s805] sm:$0xf]
        %v810 = vld [vmem:[%s806] sm:$0xf]
        %v811 = vld [vmem:[%s807] sm:$0xf]
        %v812 = vmul.f32 %v801, %v808
        %v813 = vmul.f32 %v803, %v810
        %v814 = vsub.f32 %v812, %v813
        %v815 = vmul.f32 %v801, %v809
        %v816 = vmul.f32 %v803, %v811
        %v817 = vsub.f32 %v815, %v816
        %v818 = vmul.f32 %v803, %v808
        %v819 = vmul.f32 %v801, %v810
        %v820 = vadd.f32 %v818, %v819
        %v821 = vmul.f32 %v803, %v809
        %v822 = vmul.f32 %v801, %v811
        %v823 = vadd.f32 %v821, %v822
        %824 = vst [vmem:[%s804] sm:$0xf] %v814
        %825 = vst [vmem:[%s805] sm:$0xf] %v817
        %826 = vst [vmem:[%s806] sm:$0xf] %v820
        %827 = vst [vmem:[%s807] sm:$0xf] %v823
        %s828 = smov [#allocation12]
        %s829 = smov [#allocation16]
        %v830 = vld [vmem:[%s828] ss:$0 sm:$0xff]
        %s832 = scalar_lea.vmem %s828, 4294967295
        %v833 = vld [vmem:[%s832] sm:$0xe]
        %v834 = vlaneseq
        %v835 = vshrl.u32 %v834, 7
        %vm836 = vcmp.eq.s32.totalorder %v835, 0
        %v837 = vsel %vm836, %v830, %v833
        %s838 = scalar_lea.vmem %s828, 3
        %v839 = vld [vmem:[%s838] ss:$0 sm:$0xff]
        %840 = vst [vmem:[%s828] sm:$0xf] %v837
        %v841 = vld [vmem:[%s829] ss:$0 sm:$0xff]
        %s842 = scalar_lea.vmem %s828, 1
        %843 = vst [vmem:[%s842] sm:$0x1] %v841
        %s844 = scalar_lea.vmem %s829, 1
        %v845 = vld [vmem:[%s844] sm:$0x7]
        %v846 = vlaneseq
        %v847 = vshrl.u32 %v846, 7
        %vm848 = vcmp.eq.s32.totalorder %v847, 3
        %v849 = vsel %vm848, %v839, %v845
        %v850 = vld [vmem:[%s829] ss:$0 sm:$0xff]
        %851 = vst [vmem:[%s829] sm:$0xf] %v849
        %s852 = smov [#allocation14]
        %s853 = smov [#allocation18]
        %v854 = vld [vmem:[%s852] ss:$0 sm:$0xff]
        %s856 = scalar_lea.vmem %s852, 4294967295
        %v857 = vld [vmem:[%s856] sm:$0xe]
        %v858 = vlaneseq
        %v859 = vshrl.u32 %v858, 7
        %vm860 = vcmp.eq.s32.totalorder %v859, 0
        %v861 = vsel %vm860, %v854, %v857
        %s862 = scalar_lea.vmem %s852, 3
        %v863 = vld [vmem:[%s862] ss:$0 sm:$0xff]
        %864 = vst [vmem:[%s852] sm:$0xf] %v861
        %v865 = vld [vmem:[%s853] ss:$0 sm:$0xff]
        %s866 = scalar_lea.vmem %s852, 1
        %867 = vst [vmem:[%s866] sm:$0x1] %v865
        %s868 = scalar_lea.vmem %s853, 1
        %v869 = vld [vmem:[%s868] sm:$0x7]
        %v870 = vlaneseq
        %v871 = vshrl.u32 %v870, 7
        %vm872 = vcmp.eq.s32.totalorder %v871, 3
        %v873 = vsel %vm872, %v863, %v869
        %v874 = vld [vmem:[%s853] ss:$0 sm:$0xff]
        %875 = vst [vmem:[%s853] sm:$0xf] %v873
      $region101: #{custom-call.2} parent=93 // loop_footer
        %s396 = sadd.s32 1, %s392
      $region102: #{custom-call.2} parent=93 // loop_footer_branch
        %391 = sbr.rel target = $region98
      $region103: #{custom-call.2} parent=93 // loop_exit
        _
      %s876 = sadd.s32 %s294, 1
    $region94: #{custom-call.2} parent=1 // loop_footer
      _
    $region95: #{custom-call.2} parent=1 // loop_footer_branch
      %293 = sbr.rel target = $region91
    $region96: #{custom-call.2} parent=1 // loop_exit
      _
    %s879 = smov [#allocation20]
    %s880 = smov [#allocation8]
    %v881 = vlaneseq
    %v882 = vand.u32 %v881, 127
    %v883 = vmov %v882
    %v884 = vlaneseq
    %v885 = vshrl.u32 %v884, 7
    %v886 = vmov %v885
    %v887 = vld [vmem:[%s879] sm:$0xf]
    %vm890 = vcmp.eq.s32.totalorder %v886, %v883
    %v891 = vsel %vm890, %v887, 0.0
    %v892 = vrot.slane %v891, 4
    %v893 = vadd.f32 %v891, %v892
    %v894 = vrot.slane %v893, 2
    %v895 = vadd.f32 %v893, %v894
    %v896 = vrot.slane %v895, 1
    %v897 = vadd.f32 %v895, %v896
    %898 = vst [vmem:[%s880] sm:$0x1] %v897
    %s899 = smov [#allocation23]
    %s900 = smov [#allocation10]
    %v901 = vlaneseq
    %v902 = vand.u32 %v901, 127
    %v903 = vmov %v902
    %v904 = vlaneseq
    %v905 = vshrl.u32 %v904, 7
    %v906 = vmov %v905
    %v907 = vld [vmem:[%s899] sm:$0xf]
    %vm910 = vcmp.eq.s32.totalorder %v906, %v903
    %v911 = vsel %vm910, %v907, 0.0
    %v912 = vrot.slane %v911, 4
    %v913 = vadd.f32 %v911, %v912
    %v914 = vrot.slane %v913, 2
    %v915 = vadd.f32 %v913, %v914
    %v916 = vrot.slane %v915, 1
    %v917 = vadd.f32 %v915, %v916
    %918 = vst [vmem:[%s900] sm:$0x1] %v917
    %s920 = ssub.s32 2, 1
    %v921 = vld [vmem:[#allocation8] sm:%s920]
    %s923 = ssub.s32 2, 1
    %924 = vst [vmem:[#allocation9] sm:%s923] %v921
    %s926 = ssub.s32 2, 1
    %v927 = vld [vmem:[#allocation10] sm:%s926]
    %s929 = ssub.s32 2, 1
    %930 = vst [vmem:[#allocation11] sm:%s929] %v927
    %s932 = ssub.s32 16, 1
    %v933 = vld [vmem:[#allocation12] sm:%s932]
    %s935 = ssub.s32 16, 1
    %936 = vst [vmem:[#allocation13] sm:%s935] %v933
    %s938 = ssub.s32 16, 1
    %v939 = vld [vmem:[#allocation14] sm:%s938]
    %s941 = ssub.s32 16, 1
    %942 = vst [vmem:[#allocation15] sm:%s941] %v939
    %s944 = ssub.s32 16, 1
    %v945 = vld [vmem:[#allocation16] sm:%s944]
    %s947 = ssub.s32 16, 1
    %948 = vst [vmem:[#allocation17] sm:%s947] %v945
    %s950 = ssub.s32 16, 1
    %v951 = vld [vmem:[#allocation18] sm:%s950]
    %s953 = ssub.s32 16, 1
    %954 = vst [vmem:[#allocation19] sm:%s953] %v951
    // Predicated region
    $region104: #{custom-call.2} parent=1 // pred_check
      _
    $region105: #{custom-call.2} parent=1 // pred_check_branch
      %956 = sbr.rel (0) target = $region107
    $region106: #{custom-call.2} parent=1 // pred_region
      // Predicated region
      $region108: #{custom-call.2} parent=106 // pred_check
        _
      $region109: #{custom-call.2} parent=106 // pred_check_branch
        %958 = sbr.rel (0) target = $region111
      $region110: #{custom-call.2} parent=106 // pred_region
        %p960 = scmp.gt.s32.totalorder 0, 0
        // Predicated region
        $region112: #{custom-call.2} parent=110 // pred_check
          %p961 = pneg %p960
        $region113: #{custom-call.2} parent=110 // pred_check_branch
          %963 = sbr.rel (%p961) target = $region115
        $region114: #{custom-call.2} parent=110 // pred_region
          %s964 = ssub.s32 0, 1
          %s965 = smul.u32 %s964, 8
          %s966 = scalar_lea.vmem [#allocation9], %s965
          %v967 = vld [vmem:[#allocation9] sm:$0xff]
          // While loop
          $region116: #{custom-call.2} parent=114 // loop_pre_header
            _
          $region117: #{custom-call.2} parent=114 // loop_header
            %s968 = sphi [#allocation9], %s990
            %s969 = sphi %s4, %s991
            %v970 = vphi %v967, %v992
            %s971 = ssub.s32 %s966, 64
            %p972 = scmp.gt.s32.totalorder %s968, %s971
          $region118: #{custom-call.2} parent=114 // loop_header_branch
            %974 = sbr.rel (%p972) target = $region122
          $region119: #{custom-call.2} parent=114 // loop_body
            %975 = vst [vmem:[%s969] sm:$0xff] %v970
            %v976 = vld [vmem:[%s968 + $0x8] sm:$0xff]
            %977 = vst [vmem:[%s969 + $0x8] sm:$0xff] %v976
            %v978 = vld [vmem:[%s968 + $0x10] sm:$0xff]
            %979 = vst [vmem:[%s969 + $0x10] sm:$0xff] %v978
            %v980 = vld [vmem:[%s968 + $0x18] sm:$0xff]
            %981 = vst [vmem:[%s969 + $0x18] sm:$0xff] %v980
            %v982 = vld [vmem:[%s968 + $0x20] sm:$0xff]
            %983 = vst [vmem:[%s969 + $0x20] sm:$0xff] %v982
            %v984 = vld [vmem:[%s968 + $0x28] sm:$0xff]
            %985 = vst [vmem:[%s969 + $0x28] sm:$0xff] %v984
            %v986 = vld [vmem:[%s968 + $0x30] sm:$0xff]
            %987 = vst [vmem:[%s969 + $0x30] sm:$0xff] %v986
            %v988 = vld [vmem:[%s968 + $0x38] sm:$0xff]
            %989 = vst [vmem:[%s969 + $0x38] sm:$0xff] %v988
          $region120: #{custom-call.2} parent=114 // loop_footer
            %s990 = scalar_lea.vmem %s968, 64
            %s991 = scalar_lea.vmem %s969, 64
            %v992 = vld [vmem:[%s968 + $0x40] sm:$0xff]
          $region121: #{custom-call.2} parent=114 // loop_footer_branch
            %993 = sbr.rel target = $region117
          $region122: #{custom-call.2} parent=114 // loop_exit
            _
          // While loop
          $region123: #{custom-call.2} parent=114 // loop_pre_header
            _
          $region124: #{custom-call.2} parent=114 // loop_header
            %s994 = sphi %s968, %s1002
            %s995 = sphi %s969, %s1003
            %v996 = vphi %v970, %v996
            %p997 = scmp.gt.s32.totalorder %s994, %s966
          $region125: #{custom-call.2} parent=114 // loop_header_branch
            %999 = sbr.rel (%p997) target = $region129
          $region126: #{custom-call.2} parent=114 // loop_body
            %v1000 = vld [vmem:[%s994] sm:$0xff]
            %1001 = vst [vmem:[%s995] sm:$0xff] %v1000
          $region127: #{custom-call.2} parent=114 // loop_footer
            %s1002 = scalar_lea.vmem %s994, 8
            %s1003 = scalar_lea.vmem %s995, 8
          $region128: #{custom-call.2} parent=114 // loop_footer_branch
            %1004 = sbr.rel target = $region124
          $region129: #{custom-call.2} parent=114 // loop_exit
            _
        $region115: #{custom-call.2} parent=110 // pred_fallthru
          _
        %s1006 = ssub.s32 2, 1
        %s1007 = smul.u32 0, 8
        %s1008 = scalar_lea.vmem %s4, %s1007
        %s1009 = smul.u32 0, 8
        %s1010 = scalar_lea.vmem [#allocation9], %s1009
        %v1011 = vld [vmem:[%s1010] sm:%s1006]
        %1012 = vst [vmem:[%s1008] sm:%s1006] %v1011
      $region111: #{custom-call.2} parent=106 // pred_fallthru
        _
    $region107: #{custom-call.2} parent=1 // pred_fallthru
      _
    // Predicated region
    $region130: #{custom-call.2} parent=1 // pred_check
      _
    $region131: #{custom-call.2} parent=1 // pred_check_branch
      %1014 = sbr.rel (0) target = $region133
    $region132: #{custom-call.2} parent=1 // pred_region
      // Predicated region
      $region134: #{custom-call.2} parent=132 // pred_check
        _
      $region135: #{custom-call.2} parent=132 // pred_check_branch
        %1016 = sbr.rel (0) target = $region137
      $region136: #{custom-call.2} parent=132 // pred_region
        %p1018 = scmp.gt.s32.totalorder 0, 0
        // Predicated region
        $region138: #{custom-call.2} parent=136 // pred_check
          %p1019 = pneg %p1018
        $region139: #{custom-call.2} parent=136 // pred_check_branch
          %1021 = sbr.rel (%p1019) target = $region141
        $region140: #{custom-call.2} parent=136 // pred_region
          %s1022 = ssub.s32 0, 1
          %s1023 = smul.u32 %s1022, 8
          %s1024 = scalar_lea.vmem [#allocation11], %s1023
          %v1025 = vld [vmem:[#allocation11] sm:$0xff]
          // While loop
          $region142: #{custom-call.2} parent=140 // loop_pre_header
            _
          $region143: #{custom-call.2} parent=140 // loop_header
            %s1026 = sphi [#allocation11], %s1048
            %s1027 = sphi %s5, %s1049
            %v1028 = vphi %v1025, %v1050
            %s1029 = ssub.s32 %s1024, 64
            %p1030 = scmp.gt.s32.totalorder %s1026, %s1029
          $region144: #{custom-call.2} parent=140 // loop_header_branch
            %1032 = sbr.rel (%p1030) target = $region148
          $region145: #{custom-call.2} parent=140 // loop_body
            %1033 = vst [vmem:[%s1027] sm:$0xff] %v1028
            %v1034 = vld [vmem:[%s1026 + $0x8] sm:$0xff]
            %1035 = vst [vmem:[%s1027 + $0x8] sm:$0xff] %v1034
            %v1036 = vld [vmem:[%s1026 + $0x10] sm:$0xff]
            %1037 = vst [vmem:[%s1027 + $0x10] sm:$0xff] %v1036
            %v1038 = vld [vmem:[%s1026 + $0x18] sm:$0xff]
            %1039 = vst [vmem:[%s1027 + $0x18] sm:$0xff] %v1038
            %v1040 = vld [vmem:[%s1026 + $0x20] sm:$0xff]
            %1041 = vst [vmem:[%s1027 + $0x20] sm:$0xff] %v1040
            %v1042 = vld [vmem:[%s1026 + $0x28] sm:$0xff]
            %1043 = vst [vmem:[%s1027 + $0x28] sm:$0xff] %v1042
            %v1044 = vld [vmem:[%s1026 + $0x30] sm:$0xff]
            %1045 = vst [vmem:[%s1027 + $0x30] sm:$0xff] %v1044
            %v1046 = vld [vmem:[%s1026 + $0x38] sm:$0xff]
            %1047 = vst [vmem:[%s1027 + $0x38] sm:$0xff] %v1046
          $region146: #{custom-call.2} parent=140 // loop_footer
            %s1048 = scalar_lea.vmem %s1026, 64
            %s1049 = scalar_lea.vmem %s1027, 64
            %v1050 = vld [vmem:[%s1026 + $0x40] sm:$0xff]
          $region147: #{custom-call.2} parent=140 // loop_footer_branch
            %1051 = sbr.rel target = $region143
          $region148: #{custom-call.2} parent=140 // loop_exit
            _
          // While loop
          $region149: #{custom-call.2} parent=140 // loop_pre_header
            _
          $region150: #{custom-call.2} parent=140 // loop_header
            %s1052 = sphi %s1026, %s1060
            %s1053 = sphi %s1027, %s1061
            %v1054 = vphi %v1028, %v1054
            %p1055 = scmp.gt.s32.totalorder %s1052, %s1024
          $region151: #{custom-call.2} parent=140 // loop_header_branch
            %1057 = sbr.rel (%p1055) target = $region155
          $region152: #{custom-call.2} parent=140 // loop_body
            %v1058 = vld [vmem:[%s1052] sm:$0xff]
            %1059 = vst [vmem:[%s1053] sm:$0xff] %v1058
          $region153: #{custom-call.2} parent=140 // loop_footer
            %s1060 = scalar_lea.vmem %s1052, 8
            %s1061 = scalar_lea.vmem %s1053, 8
          $region154: #{custom-call.2} parent=140 // loop_footer_branch
            %1062 = sbr.rel target = $region150
          $region155: #{custom-call.2} parent=140 // loop_exit
            _
        $region141: #{custom-call.2} parent=136 // pred_fallthru
          _
        %s1064 = ssub.s32 2, 1
        %s1065 = smul.u32 0, 8
        %s1066 = scalar_lea.vmem %s5, %s1065
        %s1067 = smul.u32 0, 8
        %s1068 = scalar_lea.vmem [#allocation11], %s1067
        %v1069 = vld [vmem:[%s1068] sm:%s1064]
        %1070 = vst [vmem:[%s1066] sm:%s1064] %v1069
      $region137: #{custom-call.2} parent=132 // pred_fallthru
        _
    $region133: #{custom-call.2} parent=1 // pred_fallthru
      _
    // Predicated region
    $region156: #{custom-call.2} parent=1 // pred_check
      _
    $region157: #{custom-call.2} parent=1 // pred_check_branch
      %1072 = sbr.rel (0) target = $region159
    $region158: #{custom-call.2} parent=1 // pred_region
      %p1074 = scmp.gt.s32.totalorder 0, 0
      // Predicated region
      $region160: #{custom-call.2} parent=158 // pred_check
        %p1075 = pneg %p1074
      $region161: #{custom-call.2} parent=158 // pred_check_branch
        %1077 = sbr.rel (%p1075) target = $region163
      $region162: #{custom-call.2} parent=158 // pred_region
        %s1078 = ssub.s32 0, 1
        %s1079 = smul.u32 %s1078, 8
        %s1080 = scalar_lea.vmem [#allocation13], %s1079
        %v1081 = vld [vmem:[#allocation13] sm:$0xff]
        // While loop
        $region164: #{custom-call.2} parent=162 // loop_pre_header
          _
        $region165: #{custom-call.2} parent=162 // loop_header
          %s1082 = sphi [#allocation13], %s1104
          %s1083 = sphi %s6, %s1105
          %v1084 = vphi %v1081, %v1106
          %s1085 = ssub.s32 %s1080, 64
          %p1086 = scmp.gt.s32.totalorder %s1082, %s1085
        $region166: #{custom-call.2} parent=162 // loop_header_branch
          %1088 = sbr.rel (%p1086) target = $region170
        $region167: #{custom-call.2} parent=162 // loop_body
          %1089 = vst [vmem:[%s1083] sm:$0xff] %v1084
          %v1090 = vld [vmem:[%s1082 + $0x8] sm:$0xff]
          %1091 = vst [vmem:[%s1083 + $0x8] sm:$0xff] %v1090
          %v1092 = vld [vmem:[%s1082 + $0x10] sm:$0xff]
          %1093 = vst [vmem:[%s1083 + $0x10] sm:$0xff] %v1092
          %v1094 = vld [vmem:[%s1082 + $0x18] sm:$0xff]
          %1095 = vst [vmem:[%s1083 + $0x18] sm:$0xff] %v1094
          %v1096 = vld [vmem:[%s1082 + $0x20] sm:$0xff]
          %1097 = vst [vmem:[%s1083 + $0x20] sm:$0xff] %v1096
          %v1098 = vld [vmem:[%s1082 + $0x28] sm:$0xff]
          %1099 = vst [vmem:[%s1083 + $0x28] sm:$0xff] %v1098
          %v1100 = vld [vmem:[%s1082 + $0x30] sm:$0xff]
          %1101 = vst [vmem:[%s1083 + $0x30] sm:$0xff] %v1100
          %v1102 = vld [vmem:[%s1082 + $0x38] sm:$0xff]
          %1103 = vst [vmem:[%s1083 + $0x38] sm:$0xff] %v1102
        $region168: #{custom-call.2} parent=162 // loop_footer
          %s1104 = scalar_lea.vmem %s1082, 64
          %s1105 = scalar_lea.vmem %s1083, 64
          %v1106 = vld [vmem:[%s1082 + $0x40] sm:$0xff]
        $region169: #{custom-call.2} parent=162 // loop_footer_branch
          %1107 = sbr.rel target = $region165
        $region170: #{custom-call.2} parent=162 // loop_exit
          _
        // While loop
        $region171: #{custom-call.2} parent=162 // loop_pre_header
          _
        $region172: #{custom-call.2} parent=162 // loop_header
          %s1108 = sphi %s1082, %s1116
          %s1109 = sphi %s1083, %s1117
          %v1110 = vphi %v1084, %v1110
          %p1111 = scmp.gt.s32.totalorder %s1108, %s1080
        $region173: #{custom-call.2} parent=162 // loop_header_branch
          %1113 = sbr.rel (%p1111) target = $region177
        $region174: #{custom-call.2} parent=162 // loop_body
          %v1114 = vld [vmem:[%s1108] sm:$0xff]
          %1115 = vst [vmem:[%s1109] sm:$0xff] %v1114
        $region175: #{custom-call.2} parent=162 // loop_footer
          %s1116 = scalar_lea.vmem %s1108, 8
          %s1117 = scalar_lea.vmem %s1109, 8
        $region176: #{custom-call.2} parent=162 // loop_footer_branch
          %1118 = sbr.rel target = $region172
        $region177: #{custom-call.2} parent=162 // loop_exit
          _
      $region163: #{custom-call.2} parent=158 // pred_fallthru
        _
      %s1120 = ssub.s32 16, 1
      %s1121 = smul.u32 0, 8
      %s1122 = scalar_lea.vmem %s6, %s1121
      %s1123 = smul.u32 0, 8
      %s1124 = scalar_lea.vmem [#allocation13], %s1123
      %v1125 = vld [vmem:[%s1124] sm:%s1120]
      %1126 = vst [vmem:[%s1122] sm:%s1120] %v1125
    $region159: #{custom-call.2} parent=1 // pred_fallthru
      _
    // Predicated region
    $region178: #{custom-call.2} parent=1 // pred_check
      _
    $region179: #{custom-call.2} parent=1 // pred_check_branch
      %1128 = sbr.rel (0) target = $region181
    $region180: #{custom-call.2} parent=1 // pred_region
      %p1130 = scmp.gt.s32.totalorder 0, 0
      // Predicated region
      $region182: #{custom-call.2} parent=180 // pred_check
        %p1131 = pneg %p1130
      $region183: #{custom-call.2} parent=180 // pred_check_branch
        %1133 = sbr.rel (%p1131) target = $region185
      $region184: #{custom-call.2} parent=180 // pred_region
        %s1134 = ssub.s32 0, 1
        %s1135 = smul.u32 %s1134, 8
        %s1136 = scalar_lea.vmem [#allocation15], %s1135
        %v1137 = vld [vmem:[#allocation15] sm:$0xff]
        // While loop
        $region186: #{custom-call.2} parent=184 // loop_pre_header
          _
        $region187: #{custom-call.2} parent=184 // loop_header
          %s1138 = sphi [#allocation15], %s1160
          %s1139 = sphi %s7, %s1161
          %v1140 = vphi %v1137, %v1162
          %s1141 = ssub.s32 %s1136, 64
          %p1142 = scmp.gt.s32.totalorder %s1138, %s1141
        $region188: #{custom-call.2} parent=184 // loop_header_branch
          %1144 = sbr.rel (%p1142) target = $region192
        $region189: #{custom-call.2} parent=184 // loop_body
          %1145 = vst [vmem:[%s1139] sm:$0xff] %v1140
          %v1146 = vld [vmem:[%s1138 + $0x8] sm:$0xff]
          %1147 = vst [vmem:[%s1139 + $0x8] sm:$0xff] %v1146
          %v1148 = vld [vmem:[%s1138 + $0x10] sm:$0xff]
          %1149 = vst [vmem:[%s1139 + $0x10] sm:$0xff] %v1148
          %v1150 = vld [vmem:[%s1138 + $0x18] sm:$0xff]
          %1151 = vst [vmem:[%s1139 + $0x18] sm:$0xff] %v1150
          %v1152 = vld [vmem:[%s1138 + $0x20] sm:$0xff]
          %1153 = vst [vmem:[%s1139 + $0x20] sm:$0xff] %v1152
          %v1154 = vld [vmem:[%s1138 + $0x28] sm:$0xff]
          %1155 = vst [vmem:[%s1139 + $0x28] sm:$0xff] %v1154
          %v1156 = vld [vmem:[%s1138 + $0x30] sm:$0xff]
          %1157 = vst [vmem:[%s1139 + $0x30] sm:$0xff] %v1156
          %v1158 = vld [vmem:[%s1138 + $0x38] sm:$0xff]
          %1159 = vst [vmem:[%s1139 + $0x38] sm:$0xff] %v1158
        $region190: #{custom-call.2} parent=184 // loop_footer
          %s1160 = scalar_lea.vmem %s1138, 64
          %s1161 = scalar_lea.vmem %s1139, 64
          %v1162 = vld [vmem:[%s1138 + $0x40] sm:$0xff]
        $region191: #{custom-call.2} parent=184 // loop_footer_branch
          %1163 = sbr.rel target = $region187
        $region192: #{custom-call.2} parent=184 // loop_exit
          _
        // While loop
        $region193: #{custom-call.2} parent=184 // loop_pre_header
          _
        $region194: #{custom-call.2} parent=184 // loop_header
          %s1164 = sphi %s1138, %s1172
          %s1165 = sphi %s1139, %s1173
          %v1166 = vphi %v1140, %v1166
          %p1167 = scmp.gt.s32.totalorder %s1164, %s1136
        $region195: #{custom-call.2} parent=184 // loop_header_branch
          %1169 = sbr.rel (%p1167) target = $region199
        $region196: #{custom-call.2} parent=184 // loop_body
          %v1170 = vld [vmem:[%s1164] sm:$0xff]
          %1171 = vst [vmem:[%s1165] sm:$0xff] %v1170
        $region197: #{custom-call.2} parent=184 // loop_footer
          %s1172 = scalar_lea.vmem %s1164, 8
          %s1173 = scalar_lea.vmem %s1165, 8
        $region198: #{custom-call.2} parent=184 // loop_footer_branch
          %1174 = sbr.rel target = $region194
        $region199: #{custom-call.2} parent=184 // loop_exit
          _
      $region185: #{custom-call.2} parent=180 // pred_fallthru
        _
      %s1176 = ssub.s32 16, 1
      %s1177 = smul.u32 0, 8
      %s1178 = scalar_lea.vmem %s7, %s1177
      %s1179 = smul.u32 0, 8
      %s1180 = scalar_lea.vmem [#allocation15], %s1179
      %v1181 = vld [vmem:[%s1180] sm:%s1176]
      %1182 = vst [vmem:[%s1178] sm:%s1176] %v1181
    $region181: #{custom-call.2} parent=1 // pred_fallthru
      _
    // Predicated region
    $region200: #{custom-call.2} parent=1 // pred_check
      _
    $region201: #{custom-call.2} parent=1 // pred_check_branch
      %1184 = sbr.rel (0) target = $region203
    $region202: #{custom-call.2} parent=1 // pred_region
      %p1186 = scmp.gt.s32.totalorder 0, 0
      // Predicated region
      $region204: #{custom-call.2} parent=202 // pred_check
        %p1187 = pneg %p1186
      $region205: #{custom-call.2} parent=202 // pred_check_branch
        %1189 = sbr.rel (%p1187) target = $region207
      $region206: #{custom-call.2} parent=202 // pred_region
        %s1190 = ssub.s32 0, 1
        %s1191 = smul.u32 %s1190, 8
        %s1192 = scalar_lea.vmem [#allocation17], %s1191
        %v1193 = vld [vmem:[#allocation17] sm:$0xff]
        // While loop
        $region208: #{custom-call.2} parent=206 // loop_pre_header
          _
        $region209: #{custom-call.2} parent=206 // loop_header
          %s1194 = sphi [#allocation17], %s1216
          %s1195 = sphi %s8, %s1217
          %v1196 = vphi %v1193, %v1218
          %s1197 = ssub.s32 %s1192, 64
          %p1198 = scmp.gt.s32.totalorder %s1194, %s1197
        $region210: #{custom-call.2} parent=206 // loop_header_branch
          %1200 = sbr.rel (%p1198) target = $region214
        $region211: #{custom-call.2} parent=206 // loop_body
          %1201 = vst [vmem:[%s1195] sm:$0xff] %v1196
          %v1202 = vld [vmem:[%s1194 + $0x8] sm:$0xff]
          %1203 = vst [vmem:[%s1195 + $0x8] sm:$0xff] %v1202
          %v1204 = vld [vmem:[%s1194 + $0x10] sm:$0xff]
          %1205 = vst [vmem:[%s1195 + $0x10] sm:$0xff] %v1204
          %v1206 = vld [vmem:[%s1194 + $0x18] sm:$0xff]
          %1207 = vst [vmem:[%s1195 + $0x18] sm:$0xff] %v1206
          %v1208 = vld [vmem:[%s1194 + $0x20] sm:$0xff]
          %1209 = vst [vmem:[%s1195 + $0x20] sm:$0xff] %v1208
          %v1210 = vld [vmem:[%s1194 + $0x28] sm:$0xff]
          %1211 = vst [vmem:[%s1195 + $0x28] sm:$0xff] %v1210
          %v1212 = vld [vmem:[%s1194 + $0x30] sm:$0xff]
          %1213 = vst [vmem:[%s1195 + $0x30] sm:$0xff] %v1212
          %v1214 = vld [vmem:[%s1194 + $0x38] sm:$0xff]
          %1215 = vst [vmem:[%s1195 + $0x38] sm:$0xff] %v1214
        $region212: #{custom-call.2} parent=206 // loop_footer
          %s1216 = scalar_lea.vmem %s1194, 64
          %s1217 = scalar_lea.vmem %s1195, 64
          %v1218 = vld [vmem:[%s1194 + $0x40] sm:$0xff]
        $region213: #{custom-call.2} parent=206 // loop_footer_branch
          %1219 = sbr.rel target = $region209
        $region214: #{custom-call.2} parent=206 // loop_exit
          _
        // While loop
        $region215: #{custom-call.2} parent=206 // loop_pre_header
          _
        $region216: #{custom-call.2} parent=206 // loop_header
          %s1220 = sphi %s1194, %s1228
          %s1221 = sphi %s1195, %s1229
          %v1222 = vphi %v1196, %v1222
          %p1223 = scmp.gt.s32.totalorder %s1220, %s1192
        $region217: #{custom-call.2} parent=206 // loop_header_branch
          %1225 = sbr.rel (%p1223) target = $region221
        $region218: #{custom-call.2} parent=206 // loop_body
          %v1226 = vld [vmem:[%s1220] sm:$0xff]
          %1227 = vst [vmem:[%s1221] sm:$0xff] %v1226
        $region219: #{custom-call.2} parent=206 // loop_footer
          %s1228 = scalar_lea.vmem %s1220, 8
          %s1229 = scalar_lea.vmem %s1221, 8
        $region220: #{custom-call.2} parent=206 // loop_footer_branch
          %1230 = sbr.rel target = $region216
        $region221: #{custom-call.2} parent=206 // loop_exit
          _
      $region207: #{custom-call.2} parent=202 // pred_fallthru
        _
      %s1232 = ssub.s32 16, 1
      %s1233 = smul.u32 0, 8
      %s1234 = scalar_lea.vmem %s8, %s1233
      %s1235 = smul.u32 0, 8
      %s1236 = scalar_lea.vmem [#allocation17], %s1235
      %v1237 = vld [vmem:[%s1236] sm:%s1232]
      %1238 = vst [vmem:[%s1234] sm:%s1232] %v1237
    $region203: #{custom-call.2} parent=1 // pred_fallthru
      _
    // Predicated region
    $region222: #{custom-call.2} parent=1 // pred_check
      _
    $region223: #{custom-call.2} parent=1 // pred_check_branch
      %1240 = sbr.rel (0) target = $region225
    $region224: #{custom-call.2} parent=1 // pred_region
      %p1242 = scmp.gt.s32.totalorder 0, 0
      // Predicated region
      $region226: #{custom-call.2} parent=224 // pred_check
        %p1243 = pneg %p1242
      $region227: #{custom-call.2} parent=224 // pred_check_branch
        %1245 = sbr.rel (%p1243) target = $region229
      $region228: #{custom-call.2} parent=224 // pred_region
        %s1246 = ssub.s32 0, 1
        %s1247 = smul.u32 %s1246, 8
        %s1248 = scalar_lea.vmem [#allocation19], %s1247
        %v1249 = vld [vmem:[#allocation19] sm:$0xff]
        // While loop
        $region230: #{custom-call.2} parent=228 // loop_pre_header
          _
        $region231: #{custom-call.2} parent=228 // loop_header
          %s1250 = sphi [#allocation19], %s1272
          %s1251 = sphi %s9, %s1273
          %v1252 = vphi %v1249, %v1274
          %s1253 = ssub.s32 %s1248, 64
          %p1254 = scmp.gt.s32.totalorder %s1250, %s1253
        $region232: #{custom-call.2} parent=228 // loop_header_branch
          %1256 = sbr.rel (%p1254) target = $region236
        $region233: #{custom-call.2} parent=228 // loop_body
          %1257 = vst [vmem:[%s1251] sm:$0xff] %v1252
          %v1258 = vld [vmem:[%s1250 + $0x8] sm:$0xff]
          %1259 = vst [vmem:[%s1251 + $0x8] sm:$0xff] %v1258
          %v1260 = vld [vmem:[%s1250 + $0x10] sm:$0xff]
          %1261 = vst [vmem:[%s1251 + $0x10] sm:$0xff] %v1260
          %v1262 = vld [vmem:[%s1250 + $0x18] sm:$0xff]
          %1263 = vst [vmem:[%s1251 + $0x18] sm:$0xff] %v1262
          %v1264 = vld [vmem:[%s1250 + $0x20] sm:$0xff]
          %1265 = vst [vmem:[%s1251 + $0x20] sm:$0xff] %v1264
          %v1266 = vld [vmem:[%s1250 + $0x28] sm:$0xff]
          %1267 = vst [vmem:[%s1251 + $0x28] sm:$0xff] %v1266
          %v1268 = vld [vmem:[%s1250 + $0x30] sm:$0xff]
          %1269 = vst [vmem:[%s1251 + $0x30] sm:$0xff] %v1268
          %v1270 = vld [vmem:[%s1250 + $0x38] sm:$0xff]
          %1271 = vst [vmem:[%s1251 + $0x38] sm:$0xff] %v1270
        $region234: #{custom-call.2} parent=228 // loop_footer
          %s1272 = scalar_lea.vmem %s1250, 64
          %s1273 = scalar_lea.vmem %s1251, 64
          %v1274 = vld [vmem:[%s1250 + $0x40] sm:$0xff]
        $region235: #{custom-call.2} parent=228 // loop_footer_branch
          %1275 = sbr.rel target = $region231
        $region236: #{custom-call.2} parent=228 // loop_exit
          _
        // While loop
        $region237: #{custom-call.2} parent=228 // loop_pre_header
          _
        $region238: #{custom-call.2} parent=228 // loop_header
          %s1276 = sphi %s1250, %s1284
          %s1277 = sphi %s1251, %s1285
          %v1278 = vphi %v1252, %v1278
          %p1279 = scmp.gt.s32.totalorder %s1276, %s1248
        $region239: #{custom-call.2} parent=228 // loop_header_branch
          %1281 = sbr.rel (%p1279) target = $region243
        $region240: #{custom-call.2} parent=228 // loop_body
          %v1282 = vld [vmem:[%s1276] sm:$0xff]
          %1283 = vst [vmem:[%s1277] sm:$0xff] %v1282
        $region241: #{custom-call.2} parent=228 // loop_footer
          %s1284 = scalar_lea.vmem %s1276, 8
          %s1285 = scalar_lea.vmem %s1277, 8
        $region242: #{custom-call.2} parent=228 // loop_footer_branch
          %1286 = sbr.rel target = $region238
        $region243: #{custom-call.2} parent=228 // loop_exit
          _
      $region229: #{custom-call.2} parent=224 // pred_fallthru
        _
      %s1288 = ssub.s32 16, 1
      %s1289 = smul.u32 0, 8
      %s1290 = scalar_lea.vmem %s9, %s1289
      %s1291 = smul.u32 0, 8
      %s1292 = scalar_lea.vmem [#allocation19], %s1291
      %v1293 = vld [vmem:[%s1292] sm:%s1288]
      %1294 = vst [vmem:[%s1290] sm:%s1288] %v1293
    $region225: #{custom-call.2} parent=1 // pred_fallthru
      _
    // Predicated region
    $region244: #{custom-call.2} parent=1 // pred_check
      _
    $region245: #{custom-call.2} parent=1 // pred_check_branch
      %1296 = sbr.rel (0) target = $region247
    $region246: #{custom-call.2} parent=1 // pred_region
      _
    $region247: #{custom-call.2} parent=1 // pred_fallthru
      _
    // Predicated region
    $region248: #{custom-call.2} parent=1 // pred_check
      _
    $region249: #{custom-call.2} parent=1 // pred_check_branch
      %1298 = sbr.rel (0) target = $region251
    $region250: #{custom-call.2} parent=1 // pred_region
      _
    $region251: #{custom-call.2} parent=1 // pred_fallthru
      _

// kernel: grassmannian_mapping.2
$region0: #{grassmannian_mapping.2}
  #allocation0 [shape = 'u32[]', space=smem, size = 0x4, offset = 0x4, fixed_abs, tag = 'smem constant byte address 0x4 - core index']
  #allocation1 [shape = 'u32[72,128]{1,0:T(1,128)}', space=vmem, size = 0x9000, scoped, tag = 'internal scratch']
  %s0 = inlined_call_operand.vmem [shape: f32[1000,32], index: 0, kind: input, shape index: {}]
  %s1 = inlined_call_operand.vmem [shape: f32[8,32], index: 1, kind: input, shape index: {}]
  %s2 = inlined_call_operand.vmem [shape: f32[2,8,8], index: 2, kind: output, shape index: {0}]
  %s3 = inlined_call_operand.vmem [shape: f32[8,1024], index: 3, kind: output, shape index: {1}]
  %4 = xla_tuple %s2, %s3
  %s5 = sld [smem:[#allocation0]]
  $region53: #{grassmannian_mapping.2} parent=0
    _
  %s7 = ssub.s32 1, %s5
  %s8 = scalar_select 0, %s7, %s5
  loop: start=0, step=1, limit=6
  $region2: #{grassmannian_mapping.2} parent=0 // loop_pre_header
    _
  $region3: #{grassmannian_mapping.2} parent=0 // loop_header
    %s10 = sphi 0, %s14
    %p11 = scmp.ge.s32.totalorder %s10, 6
    %s17 = sphi 0, %s29
    %s18 = sphi 0, %s25
    %s19 = sphi 0, %s17
    %s20 = sphi 0, %s18
    %s21 = sphi 0, %s19
    %s22 = sphi 0, %s20
    %s40 = sphi 0, %s42
    %s43 = sphi 0, %s40
    %s44 = sphi 0, %s43
    %s60 = sphi 0, %s44
    %s64 = sphi 0, %s64
    %s66 = sphi 0, %s64
    %s67 = sphi 0, %s66
    %s81 = sphi 0, %s67
    %s87 = sphi 0, %s89
    %s90 = sphi 0, %s87
    %s91 = sphi 0, %s90
    %s107 = sphi 0, %s91
    %s121 = sphi 0, %s123
    %s124 = sphi 0, %s121
    %s125 = sphi 0, %s124
    %s141 = sphi 0, %s125
  $region4: #{grassmannian_mapping.2} parent=0 // loop_header_branch
    %13 = sbr.rel (%p11) target = $region8
  $region5: #{grassmannian_mapping.2} parent=0 // loop_body
    %s15 = ssub.s32 %s10, 1
    %s16 = ssub.s32 %s10, 2
    %s23 = sadd.s32 1, %s18
    %p24 = scmp.ge.s32.totalorder %s23, 2
    %s25 = scalar_select %p24, 0, %s23
    %s26 = sadd.s32 1, %s17
    %s27 = scalar_select %p24, %s26, %s17
    %p28 = scmp.ge.s32.totalorder %s27, 2
    %s29 = scalar_select %p28, 0, %s27
    %s30 = smul.u32 %s17, 2
    %s31 = sadd.s32 %s30, %s18
    %p32 = scmp.lt.s32.totalorder %s31, 3
    %s33 = scalar_select %p32, %s31, 3
    %s34 = smul.u32 %s29, 2
    %s35 = sadd.s32 %s34, %s25
    %p36 = scmp.lt.s32.totalorder %s35, 3
    %s37 = scalar_select %p36, %s35, 3
    %s38 = ssub.s32 %s33, %s37
    %p39 = scmp.eq.s32.totalorder %s38, 0
    %s41 = sadd.s32 %s40, 1
    %s42 = scalar_select %p39, %s40, %s41
    %p45 = pneg %p39
    %p46 = scmp.eq.s32.totalorder %s10, 3
    %p47 = por %p45, %p46
    %p48 = scmp.ne.s32.totalorder %s40, %s43
    %p49 = scmp.eq.s32.totalorder %s10, 0
    %p50 = por %p48, %p49
    %p51 = scmp.ne.s32.totalorder %s40, %s43
    %p52 = scmp.eq.s32.totalorder %s15, 3
    %p53 = por %p51, %p52
    %p54 = scmp.ne.s32.totalorder %s43, %s44
    %p55 = scmp.eq.s32.totalorder %s15, 0
    %p56 = por %p54, %p55
    %p57 = scmp.ne.s32.totalorder %s43, %s44
    %p58 = scmp.eq.s32.totalorder %s16, 3
    %p59 = por %p57, %p58
    %p61 = scmp.ne.s32.totalorder %s44, %s60
    %p62 = scmp.eq.s32.totalorder %s16, 0
    %p63 = por %p61, %p62
    %s65 = sadd.s32 %s64, 1
    %p68 = scmp.eq.s32.totalorder %s10, 3
    %p69 = scmp.ne.s32.totalorder %s64, %s66
    %p70 = scmp.eq.s32.totalorder %s10, 0
    %p71 = por %p69, %p70
    %p72 = scmp.ne.s32.totalorder %s64, %s66
    %p73 = scmp.eq.s32.totalorder %s15, 3
    %p74 = por %p72, %p73
    %p75 = scmp.ne.s32.totalorder %s66, %s67
    %p76 = scmp.eq.s32.totalorder %s15, 0
    %p77 = por %p75, %p76
    %p78 = scmp.ne.s32.totalorder %s66, %s67
    %p79 = scmp.eq.s32.totalorder %s16, 3
    %p80 = por %p78, %p79
    %p82 = scmp.ne.s32.totalorder %s67, %s81
    %p83 = scmp.eq.s32.totalorder %s16, 0
    %p84 = por %p82, %p83
    %s85 = ssub.s32 %s17, %s29
    %p86 = scmp.eq.s32.totalorder %s85, 0
    %s88 = sadd.s32 %s87, 1
    %s89 = scalar_select %p86, %s87, %s88
    %p92 = pneg %p86
    %p93 = scmp.eq.s32.totalorder %s10, 3
    %p94 = por %p92, %p93
    %p95 = scmp.ne.s32.totalorder %s87, %s90
    %p96 = scmp.eq.s32.totalorder %s10, 0
    %p97 = por %p95, %p96
    %p98 = scmp.ne.s32.totalorder %s87, %s90
    %p99 = scmp.eq.s32.totalorder %s15, 3
    %p100 = por %p98, %p99
    %p101 = scmp.ne.s32.totalorder %s90, %s91
    %p102 = scmp.eq.s32.totalorder %s15, 0
    %p103 = por %p101, %p102
    %p104 = scmp.ne.s32.totalorder %s90, %s91
    %p105 = scmp.eq.s32.totalorder %s16, 3
    %p106 = por %p104, %p105
    %p108 = scmp.ne.s32.totalorder %s91, %s107
    %p109 = scmp.eq.s32.totalorder %s16, 0
    %p110 = por %p108, %p109
    %s111 = smul.u32 %s17, 2
    %s112 = sadd.s32 %s111, %s18
    %p113 = scmp.lt.s32.totalorder %s112, 3
    %s114 = scalar_select %p113, %s112, 3
    %s115 = smul.u32 %s29, 2
    %s116 = sadd.s32 %s115, %s25
    %p117 = scmp.lt.s32.totalorder %s116, 3
    %s118 = scalar_select %p117, %s116, 3
    %s119 = ssub.s32 %s114, %s118
    %p120 = scmp.eq.s32.totalorder %s119, 0
    %s122 = sadd.s32 %s121, 1
    %s123 = scalar_select %p120, %s121, %s122
    %p126 = pneg %p120
    %p127 = scmp.eq.s32.totalorder %s10, 3
    %p128 = por %p126, %p127
    %p129 = scmp.ne.s32.totalorder %s121, %s124
    %p130 = scmp.eq.s32.totalorder %s10, 0
    %p131 = por %p129, %p130
    %p132 = scmp.ne.s32.totalorder %s121, %s124
    %p133 = scmp.eq.s32.totalorder %s15, 3
    %p134 = por %p132, %p133
    %p135 = scmp.ne.s32.totalorder %s124, %s125
    %p136 = scmp.eq.s32.totalorder %s15, 0
    %p137 = por %p135, %p136
    %p138 = scmp.ne.s32.totalorder %s124, %s125
    %p139 = scmp.eq.s32.totalorder %s16, 3
    %p140 = por %p138, %p139
    %p142 = scmp.ne.s32.totalorder %s125, %s141
    %p143 = scmp.eq.s32.totalorder %s16, 0
    %p144 = por %p142, %p143
    %p145 = scmp.le.s32.totalorder 1, %s10
    %p146 = scmp.lt.s32.totalorder %s10, 5
    %p147 = pnand %p145, %p146
    %p148 = pneg %p147
    // Predicated region
    $region9: #{grassmannian_mapping.2} parent=5 // pred_check
      _
    $region10: #{grassmannian_mapping.2} parent=5 // pred_check_branch
      %150 = sbr.rel (%p147) target = $region12
    $region11: #{grassmannian_mapping.2} parent=5 // pred_region
      %s151 = ssub.s32 %s10, 1
      // Predicated region
      $region13: #{grassmannian_mapping.2} parent=11 // pred_check
        %p152 = pneg %p77
      $region14: #{grassmannian_mapping.2} parent=11 // pred_check_branch
        %154 = sbr.rel (%p152) target = $region16
      $region15: #{grassmannian_mapping.2} parent=11 // pred_region
        _
      $region16: #{grassmannian_mapping.2} parent=11 // pred_fallthru
        _
    $region12: #{grassmannian_mapping.2} parent=5 // pred_fallthru
      _
    %p155 = scmp.lt.s32.totalorder %s10, 4
    // Predicated region
    $region17: #{grassmannian_mapping.2} parent=5 // pred_check
      %p156 = pneg %p155
    $region18: #{grassmannian_mapping.2} parent=5 // pred_check_branch
      %158 = sbr.rel (%p156) target = $region20
    $region19: #{grassmannian_mapping.2} parent=5 // pred_region
      // Predicated region
      $region21: #{grassmannian_mapping.2} parent=19 // pred_check
        %p159 = pneg %p50
      $region22: #{grassmannian_mapping.2} parent=19 // pred_check_branch
        %161 = sbr.rel (%p159) target = $region24
      $region23: #{grassmannian_mapping.2} parent=19 // pred_region
        %s162 = smul.u32 %s17, 2
        %s163 = sadd.s32 %s162, %s18
        %p164 = scmp.lt.s32.totalorder %s163, 3
        %s165 = scalar_select %p164, %s163, 3
        %s166 = smul.u32 32, %s165
        %s167 = ssub.s32 125, %s166
        %p168 = scmp.lt.s32.totalorder %s167, 32
        %s169 = scalar_select %p168, %s167, 32
        %s170 = smul.u32 8, %s169
        %p171 = scmp.lt.s32.totalorder %s166, 124
        %s172 = scalar_select %p171, %s166, 124
        %s173 = smul.addr %s172, 8
        %s174 = scalar_lea.vmem %s0, %s173
        %s175 = smul.u32 %s17, 2
        %s176 = sadd.s32 %s175, %s18
        %p177 = scmp.lt.s32.totalorder %s176, 3
        %s178 = scalar_select %p177, %s176, 3
        %s179 = smul.u32 32, %s178
        %s180 = ssub.s32 125, %s179
        %p181 = scmp.lt.s32.totalorder %s180, 32
        %s182 = scalar_select %p181, %s180, 32
        %s183 = smul.u32 8, %s182
      $region24: #{grassmannian_mapping.2} parent=19 // pred_fallthru
        _
    $region20: #{grassmannian_mapping.2} parent=5 // pred_fallthru
      _
    %p184 = scmp.le.s32.totalorder 1, %s10
    %p185 = scmp.lt.s32.totalorder %s10, 5
    %p186 = pnand %p184, %p185
    %p187 = pneg %p186
    // Predicated region
    $region25: #{grassmannian_mapping.2} parent=5 // pred_check
      _
    $region26: #{grassmannian_mapping.2} parent=5 // pred_check_branch
      %189 = sbr.rel (%p186) target = $region28
    $region27: #{grassmannian_mapping.2} parent=5 // pred_region
      %s190 = ssub.s32 %s10, 1
      %s191 = smul.u32 %s19, 2
      %s192 = sadd.s32 %s191, %s20
      %p193 = scmp.lt.s32.totalorder %s192, 3
      %s194 = scalar_select %p193, %s192, 3
      %s195 = smul.u32 32, %s194
      %s196 = ssub.s32 125, %s195
      %p197 = scmp.lt.s32.totalorder %s196, 32
      %s198 = scalar_select %p197, %s196, 32
      %s199 = smul.u32 8, %s198
      %p200 = scmp.lt.s32.totalorder %s195, 124
      %s201 = scalar_select %p200, %s195, 124
      %s202 = smul.addr %s201, 8
      %s203 = scalar_lea.vmem %s0, %s202
      %p204 = pneg %p56
      %p205 = pneg %p53
      %p206 = pneg %p77
      %p207 = pneg %p74
      %p208 = pneg %p103
      %p209 = pneg %p100
      %p210 = scmp.lt.s32.totalorder %s19, 1
      %s211 = scalar_select %p210, %s19, 1
      %s212 = smul.addr %s211, 8
      %s213 = scalar_lea.vmem %s2, %s212
      %p214 = pneg %p137
      %p215 = pneg %p134
      %s216 = smul.u32 %s19, 2
      %s217 = sadd.s32 %s216, %s20
      %p218 = scmp.lt.s32.totalorder %s217, 3
      %s219 = scalar_select %p218, %s217, 3
      %s220 = smul.u32 2, %s219
      %p221 = scmp.lt.s32.totalorder %s220, 7
      %s222 = scalar_select %p221, %s220, 7
      %s223 = smul.addr %s222, 8
      %s224 = scalar_lea.vmem %s3, %s223
      %s225 = smul.u32 %s19, 2
      %s226 = sadd.s32 %s225, %s20
      %p227 = scmp.lt.s32.totalorder %s226, 3
      %s228 = scalar_select %p227, %s226, 3
      %s229 = smul.u32 32, %s228
      %s230 = ssub.s32 125, %s229
      %p231 = scmp.lt.s32.totalorder %s230, 32
      %s232 = scalar_select %p231, %s230, 32
      %s233 = smul.u32 8, %s232
      %p234 = scmp.lt.s32.totalorder %s229, 124
      %s235 = scalar_select %p234, %s229, 124
      %s236 = smul.addr %s235, 8
      %s237 = scalar_lea.vmem %s0, %s236
      %s238 = smul.u32 %s19, 2
      %s239 = sadd.s32 %s238, %s20
      %p240 = scmp.lt.s32.totalorder %s239, 3
      %s241 = scalar_select %p240, %s239, 3
      %s242 = smul.u32 32, %s241
      %s243 = ssub.s32 125, %s242
      %p244 = scmp.lt.s32.totalorder %s243, 32
      %s245 = scalar_select %p244, %s243, 32
      %s246 = smul.u32 8, %s245
      %p247 = scmp.lt.s32.totalorder %s19, 1
      %s248 = scalar_select %p247, %s19, 1
      %s249 = smul.addr %s248, 8
      %s250 = scalar_lea.vmem %s2, %s249
      %s251 = smul.u32 %s19, 2
      %s252 = sadd.s32 %s251, %s20
      %p253 = scmp.lt.s32.totalorder %s252, 3
      %s254 = scalar_select %p253, %s252, 3
      %s255 = smul.u32 2, %s254
      %p256 = scmp.lt.s32.totalorder %s255, 7
      %s257 = scalar_select %p256, %s255, 7
      %s258 = smul.addr %s257, 8
      %s259 = scalar_lea.vmem %s3, %s258
      %s260 = smul.u32 %s19, 2
      %s261 = sadd.s32 %s260, %s20
      %p262 = scmp.lt.s32.totalorder %s261, 3
      %s263 = scalar_select %p262, %s261, 3
      %s264 = smul.u32 2, %s263
      %p265 = scmp.eq.s32.totalorder %s20, 0
      // Predicated region
      $region29: #{grassmannian_mapping.2} parent=27 // pred_check
        %p266 = pneg %p265
      $region30: #{grassmannian_mapping.2} parent=27 // pred_check_branch
        %268 = sbr.rel (%p266) target = $region32
      $region31: #{grassmannian_mapping.2} parent=27 // pred_region
        %vm269 = vcmask 64512
        %270 = vst.msk [vmem:[%s250] sm:$0xff] %vm269, 0.0
      $region32: #{grassmannian_mapping.2} parent=27 // pred_fallthru
        _
      %v271 = vld [vmem:[%s1] sm:$0xff]
      %v272 = vld [vmem:[%s237] sm:$0xff]
      %v273 = vld [vmem:[%s237 + $0x8] sm:$0xff]
      %v274 = vld [vmem:[%s237 + $0x10] sm:$0xff]
      %v275 = vld [vmem:[%s237 + $0x18] sm:$0xff]
      %v276 = vld [vmem:[%s237 + $0x20] sm:$0xff]
      %v277 = vld [vmem:[%s237 + $0x28] sm:$0xff]
      %v278 = vld [vmem:[%s237 + $0x30] sm:$0xff]
      %v279 = vld [vmem:[%s237 + $0x38] sm:$0xff]
      %v280 = vld [vmem:[%s237 + $0x40] sm:$0xff]
      %v281 = vld [vmem:[%s237 + $0x48] sm:$0xff]
      %v282 = vld [vmem:[%s237 + $0x50] sm:$0xff]
      %v283 = vld [vmem:[%s237 + $0x58] sm:$0xff]
      %v284 = vld [vmem:[%s237 + $0x60] sm:$0xff]
      %v285 = vld [vmem:[%s237 + $0x68] sm:$0xff]
      %v286 = vld [vmem:[%s237 + $0x70] sm:$0xff]
      %v287 = vld [vmem:[%s237 + $0x78] sm:$0xff]
      %v288 = vld [vmem:[%s237 + $0x80] sm:$0xff]
      %v289 = vld [vmem:[%s237 + $0x88] sm:$0xff]
      %v290 = vld [vmem:[%s237 + $0x90] sm:$0xff]
      %v291 = vld [vmem:[%s237 + $0x98] sm:$0xff]
      %v292 = vld [vmem:[%s237 + $0xa0] sm:$0xff]
      %v293 = vld [vmem:[%s237 + $0xa8] sm:$0xff]
      %v294 = vld [vmem:[%s237 + $0xb0] sm:$0xff]
      %v295 = vld [vmem:[%s237 + $0xb8] sm:$0xff]
      %v296 = vld [vmem:[%s237 + $0xc0] sm:$0xff]
      %v297 = vld [vmem:[%s237 + $0xc8] sm:$0xff]
      %v298 = vld [vmem:[%s237 + $0xd0] sm:$0xff]
      %v299 = vld [vmem:[%s237 + $0xd8] sm:$0xff]
      %v300 = vld [vmem:[%s237 + $0xe0] sm:$0xff]
      %v301 = vld [vmem:[%s237 + $0xe8] sm:$0xff]
      %v302 = vld [vmem:[%s237 + $0xf0] sm:$0xff]
      %v303 = vld [vmem:[%s237 + $0xf8] sm:$0xff]
      %vm304 = vcmask 261120
      %v306 = vsel %vm304, %v271, 0
      %v309 = vsel %vm304, %v272, 0
      %v312 = vsel %vm304, %v273, 0
      %v315 = vsel %vm304, %v274, 0
      %v318 = vsel %vm304, %v275, 0
      %v321 = vsel %vm304, %v276, 0
      %v324 = vsel %vm304, %v277, 0
      %v327 = vsel %vm304, %v278, 0
      %v330 = vsel %vm304, %v279, 0
      %v333 = vsel %vm304, %v280, 0
      %v336 = vsel %vm304, %v281, 0
      %v339 = vsel %vm304, %v282, 0
      %v342 = vsel %vm304, %v283, 0
      %v345 = vsel %vm304, %v284, 0
      %v348 = vsel %vm304, %v285, 0
      %v351 = vsel %vm304, %v286, 0
      %v354 = vsel %vm304, %v287, 0
      %v357 = vsel %vm304, %v288, 0
      %v360 = vsel %vm304, %v289, 0
      %v363 = vsel %vm304, %v290, 0
      %v366 = vsel %vm304, %v291, 0
      %v369 = vsel %vm304, %v292, 0
      %v372 = vsel %vm304, %v293, 0
      %v375 = vsel %vm304, %v294, 0
      %v378 = vsel %vm304, %v295, 0
      %v381 = vsel %vm304, %v296, 0
      %v384 = vsel %vm304, %v297, 0
      %v387 = vsel %vm304, %v298, 0
      %v390 = vsel %vm304, %v299, 0
      %v393 = vsel %vm304, %v300, 0
      %v396 = vsel %vm304, %v301, 0
      %v399 = vsel %vm304, %v302, 0
      %v402 = vsel %vm304, %v303, 0
      %404 = vmatpush.xpose.msra.mxu0 %v354
      %405 = vmatpush.xpose.msra.mxu0 %v351
      %406 = vmatpush.xpose.msra.mxu0 %v348
      %407 = vmatpush.xpose.msra.mxu0 %v345
      %408 = vmatpush.xpose.msra.mxu0 %v342
      %409 = vmatpush.xpose.msra.mxu0 %v339
      %410 = vmatpush.xpose.msra.mxu0 %v336
      %411 = vmatpush.xpose.msra.mxu0 %v333
      %412 = vmatpush.xpose.msra.mxu0 %v330
      %413 = vmatpush.xpose.msra.mxu0 %v327
      %414 = vmatpush.xpose.msra.mxu0 %v324
      %415 = vmatpush.xpose.msra.mxu0 %v321
      %416 = vmatpush.xpose.msra.mxu0 %v318
      %417 = vmatpush.xpose.msra.mxu0 %v315
      %418 = vmatpush.xpose.msra.mxu0 %v312
      %419 = vmatpush.xpose.msra.mxu0 %v309
      %420 = vmatmul.f32.gmra.mxu0 %v306
      %v421 = vpop.f32.mrf.mxu0
      %v422 = vadd.f32 0.0, %v421
      %423 = vdwg.mxu0
      %424 = vmatpush.xpose.msra.mxu0 %v402
      %425 = vmatpush.xpose.msra.mxu0 %v399
      %426 = vmatpush.xpose.msra.mxu0 %v396
      %427 = vmatpush.xpose.msra.mxu0 %v393
      %428 = vmatpush.xpose.msra.mxu0 %v390
      %429 = vmatpush.xpose.msra.mxu0 %v387
      %430 = vmatpush.xpose.msra.mxu0 %v384
      %431 = vmatpush.xpose.msra.mxu0 %v381
      %432 = vmatpush.xpose.msra.mxu0 %v378
      %433 = vmatpush.xpose.msra.mxu0 %v375
      %434 = vmatpush.xpose.msra.mxu0 %v372
      %435 = vmatpush.xpose.msra.mxu0 %v369
      %436 = vmatpush.xpose.msra.mxu0 %v366
      %437 = vmatpush.xpose.msra.mxu0 %v363
      %438 = vmatpush.xpose.msra.mxu0 %v360
      %439 = vmatpush.xpose.msra.mxu0 %v357
      %440 = vmatmul.f32.gmra.mxu0 %v306
      %v441 = vpop.f32.mrf.mxu0
      %v442 = vadd.f32 0.0, %v441
      %443 = vdwg.mxu0
      %444 = vst [vmem:[%s259] sm:$0xff] %v422
      %445 = vst [vmem:[%s259 + $0x8] sm:$0xff] %v442
      %s446 = smul.u32 %s19, 2
      %s447 = sadd.s32 %s446, %s20
      %s448 = smul.u32 %s447, 256
      %v449 = vlaneseq
      %v450 = vand.u32 %v449, 127
      %v451 = vadd.s32 %v450, 128
      %v452 = vstv %s448
      %v453 = vadd.s32 %v452, %v450
      %v454 = vadd.s32 %v452, %v451
      %vm455 = vcmp.lt.s32.totalorder %v453, 1000
      %vm456 = vcmp.lt.s32.totalorder %v454, 1000
      %v457 = vsel %vm455, %v422, 0.0
      %v458 = vsel %vm456, %v442, 0.0
      %v459 = vld [vmem:[%s250] sm:$0xff]
      %460 = vmatpush.xpose.msra.mxu0 0.0
      %461 = vmatpush.xpose.msra.mxu0 0.0
      %462 = vmatpush.xpose.msra.mxu0 0.0
      %463 = vmatpush.xpose.msra.mxu0 0.0
      %464 = vmatpush.xpose.msra.mxu0 0.0
      %465 = vmatpush.xpose.msra.mxu0 0.0
      %466 = vmatpush.xpose.msra.mxu0 0.0
      %467 = vmatpush.xpose.msra.mxu0 0.0
      %468 = vmatpush.xpose.msra.mxu0 0.0
      %469 = vmatpush.xpose.msra.mxu0 0.0
      %470 = vmatpush.xpose.msra.mxu0 0.0
      %471 = vmatpush.xpose.msra.mxu0 0.0
      %472 = vmatpush.xpose.msra.mxu0 0.0
      %473 = vmatpush.xpose.msra.mxu0 0.0
      %474 = vmatpush.xpose.msra.mxu0 0.0
      %475 = vmatpush.xpose.msra.mxu0 %v457
      %476 = vmatmul.f32.gmra.mxu0 %v457
      %v477 = vpop.f32.mrf.mxu0
      %v478 = vadd.f32 0.0, %v477
      %479 = vdwg.mxu0
      %480 = vmatpush.xpose.msra.mxu0 0.0
      %481 = vmatpush.xpose.msra.mxu0 0.0
      %482 = vmatpush.xpose.msra.mxu0 0.0
      %483 = vmatpush.xpose.msra.mxu0 0.0
      %484 = vmatpush.xpose.msra.mxu0 0.0
      %485 = vmatpush.xpose.msra.mxu0 0.0
      %486 = vmatpush.xpose.msra.mxu0 0.0
      %487 = vmatpush.xpose.msra.mxu0 0.0
      %488 = vmatpush.xpose.msra.mxu0 0.0
      %489 = vmatpush.xpose.msra.mxu0 0.0
      %490 = vmatpush.xpose.msra.mxu0 0.0
      %491 = vmatpush.xpose.msra.mxu0 0.0
      %492 = vmatpush.xpose.msra.mxu0 0.0
      %493 = vmatpush.xpose.msra.mxu0 0.0
      %494 = vmatpush.xpose.msra.mxu0 0.0
      %495 = vmatpush.xpose.msra.mxu0 %v458
      %496 = vmatmul.f32.gmra.mxu0 %v458
      %v497 = vpop.f32.mrf.mxu0
      %v498 = vadd.f32 %v478, %v497
      %499 = vdwg.mxu0
      %v500 = vadd.f32 %v459, %v498
      %vm501 = vcmask 64512
      %502 = vst.msk [vmem:[%s250] sm:$0xff] %vm501, %v500
      %p503 = scmp.lt.s32.totalorder %s19, 1
      %s504 = scalar_select %p503, %s19, 1
      %s505 = smul.addr %s504, 8
      %s506 = scalar_lea.vmem %s2, %s505
      %s507 = smul.u32 %s19, 2
      %s508 = sadd.s32 %s507, %s20
      %p509 = scmp.lt.s32.totalorder %s508, 3
      %s510 = scalar_select %p509, %s508, 3
      %s511 = smul.u32 2, %s510
      %p512 = scmp.lt.s32.totalorder %s511, 7
      %s513 = scalar_select %p512, %s511, 7
      %s514 = smul.addr %s513, 8
      %s515 = scalar_lea.vmem %s3, %s514
      // Predicated region
      $region33: #{grassmannian_mapping.2} parent=27 // pred_check
        %p516 = pneg %p100
      $region34: #{grassmannian_mapping.2} parent=27 // pred_check_branch
        %518 = sbr.rel (%p516) target = $region36
      $region35: #{grassmannian_mapping.2} parent=27 // pred_region
        _
      $region36: #{grassmannian_mapping.2} parent=27 // pred_fallthru
        _
      // Predicated region
      $region37: #{grassmannian_mapping.2} parent=27 // pred_check
        %p519 = pneg %p134
      $region38: #{grassmannian_mapping.2} parent=27 // pred_check_branch
        %521 = sbr.rel (%p519) target = $region40
      $region39: #{grassmannian_mapping.2} parent=27 // pred_region
        %s522 = smul.u32 %s19, 2
        %s523 = sadd.s32 %s522, %s20
        %p524 = scmp.lt.s32.totalorder %s523, 3
        %s525 = scalar_select %p524, %s523, 3
        %s526 = smul.u32 2, %s525
      $region40: #{grassmannian_mapping.2} parent=27 // pred_fallthru
        _
    $region28: #{grassmannian_mapping.2} parent=5 // pred_fallthru
      _
    %p527 = scmp.le.s32.totalorder 2, %s10
    // Predicated region
    $region41: #{grassmannian_mapping.2} parent=5 // pred_check
      %p528 = pneg %p527
    $region42: #{grassmannian_mapping.2} parent=5 // pred_check_branch
      %530 = sbr.rel (%p528) target = $region44
    $region43: #{grassmannian_mapping.2} parent=5 // pred_region
      %s531 = ssub.s32 %s10, 2
      // Predicated region
      $region45: #{grassmannian_mapping.2} parent=43 // pred_check
        %p532 = pneg %p106
      $region46: #{grassmannian_mapping.2} parent=43 // pred_check_branch
        %534 = sbr.rel (%p532) target = $region48
      $region47: #{grassmannian_mapping.2} parent=43 // pred_region
        %p535 = scmp.lt.s32.totalorder %s21, 1
        %s536 = scalar_select %p535, %s21, 1
        %s537 = smul.addr %s536, 8
        %s538 = scalar_lea.vmem %s2, %s537
      $region48: #{grassmannian_mapping.2} parent=43 // pred_fallthru
        _
      // Predicated region
      $region49: #{grassmannian_mapping.2} parent=43 // pred_check
        %p539 = pneg %p140
      $region50: #{grassmannian_mapping.2} parent=43 // pred_check_branch
        %541 = sbr.rel (%p539) target = $region52
      $region51: #{grassmannian_mapping.2} parent=43 // pred_region
        %s542 = smul.u32 %s21, 2
        %s543 = sadd.s32 %s542, %s22
        %p544 = scmp.lt.s32.totalorder %s543, 3
        %s545 = scalar_select %p544, %s543, 3
        %s546 = smul.u32 2, %s545
        %p547 = scmp.lt.s32.totalorder %s546, 7
        %s548 = scalar_select %p547, %s546, 7
        %s549 = smul.addr %s548, 8
        %s550 = scalar_lea.vmem %s3, %s549
      $region52: #{grassmannian_mapping.2} parent=43 // pred_fallthru
        _
    $region44: #{grassmannian_mapping.2} parent=5 // pred_fallthru
      _
  $region6: #{grassmannian_mapping.2} parent=0 // loop_footer
    %s14 = sadd.s32 1, %s10
  $region7: #{grassmannian_mapping.2} parent=0 // loop_footer_branch
    %9 = sbr.rel target = $region3
  $region8: #{grassmannian_mapping.2} parent=0 // loop_exit
    _

// kernel: grassmannian_mapping.3
$region0: #{grassmannian_mapping.3}
  #allocation0 [shape = 'u32[]', space=smem, size = 0x4, offset = 0x4, fixed_abs, tag = 'smem constant byte address 0x4 - core index']
  #allocation1 [shape = 'u32[72,128]{1,0:T(1,128)}', space=vmem, size = 0x9000, scoped, tag = 'internal scratch']
  %s0 = inlined_call_operand.vmem [shape: f32[8,1024], index: 0, kind: input, shape index: {}]
  %s1 = inlined_call_operand.vmem [shape: f32[8,8], index: 1, kind: input, shape index: {}]
  %s2 = inlined_call_operand.vmem [shape: f32[1000,8], index: 2, kind: output, shape index: {}]
  %s3 = sld [smem:[#allocation0]]
  $region89: #{grassmannian_mapping.3} parent=0
    _
  %s5 = ssub.s32 1, %s3
  %s6 = scalar_select 0, %s5, %s3
  $region1: #{grassmannian_mapping.3} parent=0
    #allocation2 [shape = 'u8[262144]{0}', space=vmem, size = 0x40000, scoped, tag = 'output window, operand 0']
    loop: start=0, step=1, limit=6
    $region2: #{grassmannian_mapping.3} parent=1 // loop_pre_header
      _
    $region3: #{grassmannian_mapping.3} parent=1 // loop_header
      %s8 = sphi 0, %s12
      %p9 = scmp.ge.s32.totalorder %s8, 6
      %s18 = sphi 0, %s20
      %s21 = sphi 0, %s18
      %s22 = sphi 0, %s21
      %s38 = sphi 0, %s22
      %s42 = sphi 0, %s42
      %s44 = sphi 0, %s42
      %s45 = sphi 0, %s44
      %s59 = sphi 0, %s45
      %s65 = sphi 0, %s67
      %s68 = sphi 0, %s65
      %s69 = sphi 0, %s68
      %s85 = sphi 0, %s69
    $region4: #{grassmannian_mapping.3} parent=1 // loop_header_branch
      %11 = sbr.rel (%p9) target = $region8
    $region5: #{grassmannian_mapping.3} parent=1 // loop_body
      %s13 = ssub.s32 %s8, 1
      %s14 = ssub.s32 %s8, 2
      %s15 = sadd.s32 %s8, 1
      %s16 = ssub.s32 %s8, %s15
      %p17 = scmp.eq.s32.totalorder %s16, 0
      %s19 = sadd.s32 %s18, 1
      %s20 = scalar_select %p17, %s18, %s19
      %p23 = pneg %p17
      %p24 = scmp.eq.s32.totalorder %s8, 3
      %p25 = por %p23, %p24
      %p26 = scmp.ne.s32.totalorder %s18, %s21
      %p27 = scmp.eq.s32.totalorder %s8, 0
      %p28 = por %p26, %p27
      %p29 = scmp.ne.s32.totalorder %s18, %s21
      %p30 = scmp.eq.s32.totalorder %s13, 3
      %p31 = por %p29, %p30
      %p32 = scmp.ne.s32.totalorder %s21, %s22
      %p33 = scmp.eq.s32.totalorder %s13, 0
      %p34 = por %p32, %p33
      %p35 = scmp.ne.s32.totalorder %s21, %s22
      %p36 = scmp.eq.s32.totalorder %s14, 3
      %p37 = por %p35, %p36
      %p39 = scmp.ne.s32.totalorder %s22, %s38
      %p40 = scmp.eq.s32.totalorder %s14, 0
      %p41 = por %p39, %p40
      %s43 = sadd.s32 %s42, 1
      %p46 = scmp.eq.s32.totalorder %s8, 3
      %p47 = scmp.ne.s32.totalorder %s42, %s44
      %p48 = scmp.eq.s32.totalorder %s8, 0
      %p49 = por %p47, %p48
      %p50 = scmp.ne.s32.totalorder %s42, %s44
      %p51 = scmp.eq.s32.totalorder %s13, 3
      %p52 = por %p50, %p51
      %p53 = scmp.ne.s32.totalorder %s44, %s45
      %p54 = scmp.eq.s32.totalorder %s13, 0
      %p55 = por %p53, %p54
      %p56 = scmp.ne.s32.totalorder %s44, %s45
      %p57 = scmp.eq.s32.totalorder %s14, 3
      %p58 = por %p56, %p57
      %p60 = scmp.ne.s32.totalorder %s45, %s59
      %p61 = scmp.eq.s32.totalorder %s14, 0
      %p62 = por %p60, %p61
      %s63 = ssub.s32 %s8, %s15
      %p64 = scmp.eq.s32.totalorder %s63, 0
      %s66 = sadd.s32 %s65, 1
      %s67 = scalar_select %p64, %s65, %s66
      %p70 = pneg %p64
      %p71 = scmp.eq.s32.totalorder %s8, 3
      %p72 = por %p70, %p71
      %p73 = scmp.ne.s32.totalorder %s65, %s68
      %p74 = scmp.eq.s32.totalorder %s8, 0
      %p75 = por %p73, %p74
      %p76 = scmp.ne.s32.totalorder %s65, %s68
      %p77 = scmp.eq.s32.totalorder %s13, 3
      %p78 = por %p76, %p77
      %p79 = scmp.ne.s32.totalorder %s68, %s69
      %p80 = scmp.eq.s32.totalorder %s13, 0
      %p81 = por %p79, %p80
      %p82 = scmp.ne.s32.totalorder %s68, %s69
      %p83 = scmp.eq.s32.totalorder %s14, 3
      %p84 = por %p82, %p83
      %p86 = scmp.ne.s32.totalorder %s69, %s85
      %p87 = scmp.eq.s32.totalorder %s14, 0
      %p88 = por %p86, %p87
      %p89 = scmp.le.s32.totalorder 1, %s8
      %p90 = scmp.lt.s32.totalorder %s8, 5
      %p91 = pnand %p89, %p90
      %p92 = pneg %p91
      // Predicated region
      $region9: #{grassmannian_mapping.3} parent=5 // pred_check
        _
      $region10: #{grassmannian_mapping.3} parent=5 // pred_check_branch
        %94 = sbr.rel (%p91) target = $region12
      $region11: #{grassmannian_mapping.3} parent=5 // pred_region
        %s95 = ssub.s32 %s8, 1
        // Predicated region
        $region13: #{grassmannian_mapping.3} parent=11 // pred_check
          %p96 = pneg %p55
        $region14: #{grassmannian_mapping.3} parent=11 // pred_check_branch
          %98 = sbr.rel (%p96) target = $region16
        $region15: #{grassmannian_mapping.3} parent=11 // pred_region
          _
        $region16: #{grassmannian_mapping.3} parent=11 // pred_fallthru
          _
      $region12: #{grassmannian_mapping.3} parent=5 // pred_fallthru
        _
      %p99 = scmp.lt.s32.totalorder %s8, 4
      // Predicated region
      $region17: #{grassmannian_mapping.3} parent=5 // pred_check
        %p100 = pneg %p99
      $region18: #{grassmannian_mapping.3} parent=5 // pred_check_branch
        %102 = sbr.rel (%p100) target = $region20
      $region19: #{grassmannian_mapping.3} parent=5 // pred_region
        // Predicated region
        $region21: #{grassmannian_mapping.3} parent=19 // pred_check
          %p103 = pneg %p28
        $region22: #{grassmannian_mapping.3} parent=19 // pred_check_branch
          %105 = sbr.rel (%p103) target = $region24
        $region23: #{grassmannian_mapping.3} parent=19 // pred_region
          %s106 = smul.u32 2, %s8
          %p107 = scmp.lt.s32.totalorder %s106, 7
          %s108 = scalar_select %p107, %s106, 7
          %s109 = smul.addr %s108, 8
          %s110 = scalar_lea.vmem %s0, %s109
          %s111 = smul.u32 2, %s8
        $region24: #{grassmannian_mapping.3} parent=19 // pred_fallthru
          _
      $region20: #{grassmannian_mapping.3} parent=5 // pred_fallthru
        _
      %p112 = scmp.le.s32.totalorder 1, %s8
      %p113 = scmp.lt.s32.totalorder %s8, 5
      %p114 = pnand %p112, %p113
      %p115 = pneg %p114
      // Predicated region
      $region25: #{grassmannian_mapping.3} parent=5 // pred_check
        _
      $region26: #{grassmannian_mapping.3} parent=5 // pred_check_branch
        %117 = sbr.rel (%p114) target = $region28
      $region27: #{grassmannian_mapping.3} parent=5 // pred_region
        %s118 = ssub.s32 %s8, 1
        %s119 = smul.u32 2, %s13
        %p120 = scmp.lt.s32.totalorder %s119, 7
        %s121 = scalar_select %p120, %s119, 7
        %s122 = smul.addr %s121, 8
        %s123 = scalar_lea.vmem %s0, %s122
        %p124 = pneg %p34
        %p125 = pneg %p31
        %p126 = pneg %p55
        %p127 = pneg %p52
        %p128 = pneg %p81
        %p129 = pneg %p78
        %s130 = sand.u32 %s68, 1
        %s131 = sand.u32 %s68, 1
        %s132 = smul.addr %s131, 256
        %s133 = scalar_lea.vmem [#allocation2], %s132
        %s134 = smul.u32 2, %s13
        %p135 = scmp.lt.s32.totalorder %s134, 7
        %s136 = scalar_select %p135, %s134, 7
        %s137 = smul.addr %s136, 8
        %s138 = scalar_lea.vmem %s0, %s137
        %s139 = smul.u32 2, %s13
        %s140 = smul.u32 32, %s13
        %s141 = ssub.s32 125, %s140
        %p142 = scmp.lt.s32.totalorder %s141, 32
        %s143 = scalar_select %p142, %s141, 32
        %s144 = smul.u32 8, %s143
        %v145 = vld [vmem:[%s138] sm:$0xff]
        %v146 = vld [vmem:[%s138 + $0x8] sm:$0xff]
        %v147 = vld [vmem:[%s1] sm:$0xff]
        %148 = vxpose.xlu0.b32.start [1/16] %v145, 128
        %149 = vxpose.xlu0.b32.cont [2/16] 0.0, 128
        %150 = vxpose.xlu0.b32.cont [3/16] 0.0, 128
        %151 = vxpose.xlu0.b32.cont [4/16] 0.0, 128
        %152 = vxpose.xlu0.b32.cont [5/16] 0.0, 128
        %153 = vxpose.xlu0.b32.cont [6/16] 0.0, 128
        %154 = vxpose.xlu0.b32.cont [7/16] 0.0, 128
        %155 = vxpose.xlu0.b32.cont [8/16] 0.0, 128
        %156 = vxpose.xlu0.b32.cont [9/16] 0.0, 128
        %157 = vxpose.xlu0.b32.cont [10/16] 0.0, 128
        %158 = vxpose.xlu0.b32.cont [11/16] 0.0, 128
        %159 = vxpose.xlu0.b32.cont [12/16] 0.0, 128
        %160 = vxpose.xlu0.b32.cont [13/16] 0.0, 128
        %161 = vxpose.xlu0.b32.cont [14/16] 0.0, 128
        %162 = vxpose.xlu0.b32.cont [15/16] 0.0, 128
        %163 = vxpose.xlu0.b32.end [16/16] 0.0, 128
        %v164 = vpop.trf.xlu0
        %v165 = vpop.trf.xlu0
        %v166 = vpop.trf.xlu0
        %v167 = vpop.trf.xlu0
        %v168 = vpop.trf.xlu0
        %v169 = vpop.trf.xlu0
        %v170 = vpop.trf.xlu0
        %v171 = vpop.trf.xlu0
        %v172 = vpop.trf.xlu0
        %v173 = vpop.trf.xlu0
        %v174 = vpop.trf.xlu0
        %v175 = vpop.trf.xlu0
        %v176 = vpop.trf.xlu0
        %v177 = vpop.trf.xlu0
        %v178 = vpop.trf.xlu0
        %v179 = vpop.trf.xlu0
        %180 = vxpose.xlu0.b32.start [1/16] %v146, 128
        %181 = vxpose.xlu0.b32.cont [2/16] 0.0, 128
        %182 = vxpose.xlu0.b32.cont [3/16] 0.0, 128
        %183 = vxpose.xlu0.b32.cont [4/16] 0.0, 128
        %184 = vxpose.xlu0.b32.cont [5/16] 0.0, 128
        %185 = vxpose.xlu0.b32.cont [6/16] 0.0, 128
        %186 = vxpose.xlu0.b32.cont [7/16] 0.0, 128
        %187 = vxpose.xlu0.b32.cont [8/16] 0.0, 128
        %188 = vxpose.xlu0.b32.cont [9/16] 0.0, 128
        %189 = vxpose.xlu0.b32.cont [10/16] 0.0, 128
        %190 = vxpose.xlu0.b32.cont [11/16] 0.0, 128
        %191 = vxpose.xlu0.b32.cont [12/16] 0.0, 128
        %192 = vxpose.xlu0.b32.cont [13/16] 0.0, 128
        %193 = vxpose.xlu0.b32.cont [14/16] 0.0, 128
        %194 = vxpose.xlu0.b32.cont [15/16] 0.0, 128
        %195 = vxpose.xlu0.b32.end [16/16] 0.0, 128
        %v196 = vpop.trf.xlu0
        %v197 = vpop.trf.xlu0
        %v198 = vpop.trf.xlu0
        %v199 = vpop.trf.xlu0
        %v200 = vpop.trf.xlu0
        %v201 = vpop.trf.xlu0
        %v202 = vpop.trf.xlu0
        %v203 = vpop.trf.xlu0
        %v204 = vpop.trf.xlu0
        %v205 = vpop.trf.xlu0
        %v206 = vpop.trf.xlu0
        %v207 = vpop.trf.xlu0
        %v208 = vpop.trf.xlu0
        %v209 = vpop.trf.xlu0
        %v210 = vpop.trf.xlu0
        %v211 = vpop.trf.xlu0
        %vm212 = vcmask 64512
        %v214 = vsel %vm212, %v164, 0
        %v217 = vsel %vm212, %v165, 0
        %v220 = vsel %vm212, %v166, 0
        %v223 = vsel %vm212, %v167, 0
        %v226 = vsel %vm212, %v168, 0
        %v229 = vsel %vm212, %v169, 0
        %v232 = vsel %vm212, %v170, 0
        %v235 = vsel %vm212, %v171, 0
        %v238 = vsel %vm212, %v172, 0
        %v241 = vsel %vm212, %v173, 0
        %v244 = vsel %vm212, %v174, 0
        %v247 = vsel %vm212, %v175, 0
        %v250 = vsel %vm212, %v176, 0
        %v253 = vsel %vm212, %v177, 0
        %v256 = vsel %vm212, %v178, 0
        %v259 = vsel %vm212, %v179, 0
        %v262 = vsel %vm212, %v196, 0
        %v265 = vsel %vm212, %v197, 0
        %v268 = vsel %vm212, %v198, 0
        %v271 = vsel %vm212, %v199, 0
        %v274 = vsel %vm212, %v200, 0
        %v277 = vsel %vm212, %v201, 0
        %v280 = vsel %vm212, %v202, 0
        %v283 = vsel %vm212, %v203, 0
        %v286 = vsel %vm212, %v204, 0
        %v289 = vsel %vm212, %v205, 0
        %v292 = vsel %vm212, %v206, 0
        %v295 = vsel %vm212, %v207, 0
        %v298 = vsel %vm212, %v208, 0
        %v301 = vsel %vm212, %v209, 0
        %v304 = vsel %vm212, %v210, 0
        %v307 = vsel %vm212, %v211, 0
        %309 = vmatpush.msra.mxu0 0.0
        %310 = vmatpush.msra.mxu0 0.0
        %311 = vmatpush.msra.mxu0 0.0
        %312 = vmatpush.msra.mxu0 0.0
        %313 = vmatpush.msra.mxu0 0.0
        %314 = vmatpush.msra.mxu0 0.0
        %315 = vmatpush.msra.mxu0 0.0
        %316 = vmatpush.msra.mxu0 0.0
        %317 = vmatpush.msra.mxu0 0.0
        %318 = vmatpush.msra.mxu0 0.0
        %319 = vmatpush.msra.mxu0 0.0
        %320 = vmatpush.msra.mxu0 0.0
        %321 = vmatpush.msra.mxu0 0.0
        %322 = vmatpush.msra.mxu0 0.0
        %323 = vmatpush.msra.mxu0 0.0
        %324 = vmatpush.msra.mxu0 %v147
        %325 = vmatmul.f32.gmra.mxu0 %v214
        %v326 = vpop.f32.mrf.mxu0
        %v327 = vadd.f32 0.0, %v326
        %328 = vmatmul.f32.gmra.mxu0 %v217
        %v329 = vpop.f32.mrf.mxu0
        %v330 = vadd.f32 0.0, %v329
        %331 = vmatmul.f32.gmra.mxu0 %v220
        %v332 = vpop.f32.mrf.mxu0
        %v333 = vadd.f32 0.0, %v332
        %334 = vmatmul.f32.gmra.mxu0 %v223
        %v335 = vpop.f32.mrf.mxu0
        %v336 = vadd.f32 0.0, %v335
        %337 = vmatmul.f32.gmra.mxu0 %v226
        %v338 = vpop.f32.mrf.mxu0
        %v339 = vadd.f32 0.0, %v338
        %340 = vmatmul.f32.gmra.mxu0 %v229
        %v341 = vpop.f32.mrf.mxu0
        %v342 = vadd.f32 0.0, %v341
        %343 = vmatmul.f32.gmra.mxu0 %v232
        %v344 = vpop.f32.mrf.mxu0
        %v345 = vadd.f32 0.0, %v344
        %346 = vmatmul.f32.gmra.mxu0 %v235
        %v347 = vpop.f32.mrf.mxu0
        %v348 = vadd.f32 0.0, %v347
        %349 = vmatmul.f32.gmra.mxu0 %v238
        %v350 = vpop.f32.mrf.mxu0
        %v351 = vadd.f32 0.0, %v350
        %352 = vmatmul.f32.gmra.mxu0 %v241
        %v353 = vpop.f32.mrf.mxu0
        %v354 = vadd.f32 0.0, %v353
        %355 = vmatmul.f32.gmra.mxu0 %v244
        %v356 = vpop.f32.mrf.mxu0
        %v357 = vadd.f32 0.0, %v356
        %358 = vmatmul.f32.gmra.mxu0 %v247
        %v359 = vpop.f32.mrf.mxu0
        %v360 = vadd.f32 0.0, %v359
        %361 = vmatmul.f32.gmra.mxu0 %v250
        %v362 = vpop.f32.mrf.mxu0
        %v363 = vadd.f32 0.0, %v362
        %364 = vmatmul.f32.gmra.mxu0 %v253
        %v365 = vpop.f32.mrf.mxu0
        %v366 = vadd.f32 0.0, %v365
        %367 = vmatmul.f32.gmra.mxu0 %v256
        %v368 = vpop.f32.mrf.mxu0
        %v369 = vadd.f32 0.0, %v368
        %370 = vmatmul.f32.gmra.mxu0 %v259
        %v371 = vpop.f32.mrf.mxu0
        %v372 = vadd.f32 0.0, %v371
        %373 = vmatmul.f32.gmra.mxu0 %v262
        %v374 = vpop.f32.mrf.mxu0
        %v375 = vadd.f32 0.0, %v374
        %376 = vmatmul.f32.gmra.mxu0 %v265
        %v377 = vpop.f32.mrf.mxu0
        %v378 = vadd.f32 0.0, %v377
        %379 = vmatmul.f32.gmra.mxu0 %v268
        %v380 = vpop.f32.mrf.mxu0
        %v381 = vadd.f32 0.0, %v380
        %382 = vmatmul.f32.gmra.mxu0 %v271
        %v383 = vpop.f32.mrf.mxu0
        %v384 = vadd.f32 0.0, %v383
        %385 = vmatmul.f32.gmra.mxu0 %v274
        %v386 = vpop.f32.mrf.mxu0
        %v387 = vadd.f32 0.0, %v386
        %388 = vmatmul.f32.gmra.mxu0 %v277
        %v389 = vpop.f32.mrf.mxu0
        %v390 = vadd.f32 0.0, %v389
        %391 = vmatmul.f32.gmra.mxu0 %v280
        %v392 = vpop.f32.mrf.mxu0
        %v393 = vadd.f32 0.0, %v392
        %394 = vmatmul.f32.gmra.mxu0 %v283
        %v395 = vpop.f32.mrf.mxu0
        %v396 = vadd.f32 0.0, %v395
        %397 = vmatmul.f32.gmra.mxu0 %v286
        %v398 = vpop.f32.mrf.mxu0
        %v399 = vadd.f32 0.0, %v398
        %400 = vmatmul.f32.gmra.mxu0 %v289
        %v401 = vpop.f32.mrf.mxu0
        %v402 = vadd.f32 0.0, %v401
        %403 = vmatmul.f32.gmra.mxu0 %v292
        %v404 = vpop.f32.mrf.mxu0
        %v405 = vadd.f32 0.0, %v404
        %406 = vmatmul.f32.gmra.mxu0 %v295
        %v407 = vpop.f32.mrf.mxu0
        %v408 = vadd.f32 0.0, %v407
        %409 = vmatmul.f32.gmra.mxu0 %v298
        %v410 = vpop.f32.mrf.mxu0
        %v411 = vadd.f32 0.0, %v410
        %412 = vmatmul.f32.gmra.mxu0 %v301
        %v413 = vpop.f32.mrf.mxu0
        %v414 = vadd.f32 0.0, %v413
        %415 = vmatmul.f32.gmra.mxu0 %v304
        %v416 = vpop.f32.mrf.mxu0
        %v417 = vadd.f32 0.0, %v416
        %418 = vmatmul.f32.gmra.mxu0 %v307
        %v419 = vpop.f32.mrf.mxu0
        %v420 = vadd.f32 0.0, %v419
        %421 = vdwg.mxu0
        %422 = vst.msk [vmem:[%s133] sm:$0xff] %vm212, %v327
        %423 = vst.msk [vmem:[%s133 + $0x8] sm:$0xff] %vm212, %v330
        %424 = vst.msk [vmem:[%s133 + $0x10] sm:$0xff] %vm212, %v333
        %425 = vst.msk [vmem:[%s133 + $0x18] sm:$0xff] %vm212, %v336
        %426 = vst.msk [vmem:[%s133 + $0x20] sm:$0xff] %vm212, %v339
        %427 = vst.msk [vmem:[%s133 + $0x28] sm:$0xff] %vm212, %v342
        %428 = vst.msk [vmem:[%s133 + $0x30] sm:$0xff] %vm212, %v345
        %429 = vst.msk [vmem:[%s133 + $0x38] sm:$0xff] %vm212, %v348
        %430 = vst.msk [vmem:[%s133 + $0x40] sm:$0xff] %vm212, %v351
        %431 = vst.msk [vmem:[%s133 + $0x48] sm:$0xff] %vm212, %v354
        %432 = vst.msk [vmem:[%s133 + $0x50] sm:$0xff] %vm212, %v357
        %433 = vst.msk [vmem:[%s133 + $0x58] sm:$0xff] %vm212, %v360
        %434 = vst.msk [vmem:[%s133 + $0x60] sm:$0xff] %vm212, %v363
        %435 = vst.msk [vmem:[%s133 + $0x68] sm:$0xff] %vm212, %v366
        %436 = vst.msk [vmem:[%s133 + $0x70] sm:$0xff] %vm212, %v369
        %437 = vst.msk [vmem:[%s133 + $0x78] sm:$0xff] %vm212, %v372
        %438 = vst.msk [vmem:[%s133 + $0x80] sm:$0xff] %vm212, %v375
        %439 = vst.msk [vmem:[%s133 + $0x88] sm:$0xff] %vm212, %v378
        %440 = vst.msk [vmem:[%s133 + $0x90] sm:$0xff] %vm212, %v381
        %441 = vst.msk [vmem:[%s133 + $0x98] sm:$0xff] %vm212, %v384
        %442 = vst.msk [vmem:[%s133 + $0xa0] sm:$0xff] %vm212, %v387
        %443 = vst.msk [vmem:[%s133 + $0xa8] sm:$0xff] %vm212, %v390
        %444 = vst.msk [vmem:[%s133 + $0xb0] sm:$0xff] %vm212, %v393
        %445 = vst.msk [vmem:[%s133 + $0xb8] sm:$0xff] %vm212, %v396
        %446 = vst.msk [vmem:[%s133 + $0xc0] sm:$0xff] %vm212, %v399
        %447 = vst.msk [vmem:[%s133 + $0xc8] sm:$0xff] %vm212, %v402
        %448 = vst.msk [vmem:[%s133 + $0xd0] sm:$0xff] %vm212, %v405
        %449 = vst.msk [vmem:[%s133 + $0xd8] sm:$0xff] %vm212, %v408
        %450 = vst.msk [vmem:[%s133 + $0xe0] sm:$0xff] %vm212, %v411
        %451 = vst.msk [vmem:[%s133 + $0xe8] sm:$0xff] %vm212, %v414
        %452 = vst.msk [vmem:[%s133 + $0xf0] sm:$0xff] %vm212, %v417
        %453 = vst.msk [vmem:[%s133 + $0xf8] sm:$0xff] %vm212, %v420
        %s454 = sand.u32 %s68, 1
        %s455 = sand.u32 %s68, 1
        %s456 = smul.addr %s455, 256
        %s457 = scalar_lea.vmem [#allocation2], %s456
        // Predicated region
        $region29: #{grassmannian_mapping.3} parent=27 // pred_check
          %p458 = pneg %p78
        $region30: #{grassmannian_mapping.3} parent=27 // pred_check_branch
          %460 = sbr.rel (%p458) target = $region32
        $region31: #{grassmannian_mapping.3} parent=27 // pred_region
          %s461 = smul.u32 32, %s13
          %s462 = ssub.s32 125, %s461
          %p463 = scmp.lt.s32.totalorder %s462, 32
          %s464 = scalar_select %p463, %s462, 32
          %s465 = smul.u32 8, %s464
          %p466 = scmp.ne.s32.totalorder 0, %s465
          %s467 = smul.addr %s461, 8
          %s468 = scalar_lea.vmem %s2, %s467
          // Predicated region
          $region33: #{grassmannian_mapping.3} parent=31 // pred_check
            %p469 = pneg %p466
          $region34: #{grassmannian_mapping.3} parent=31 // pred_check_branch
            %471 = sbr.rel (%p469) target = $region36
          $region35: #{grassmannian_mapping.3} parent=31 // pred_region
            // Predicated region
            $region37: #{grassmannian_mapping.3} parent=35 // pred_check
              _
            $region38: #{grassmannian_mapping.3} parent=35 // pred_check_branch
              %473 = sbr.rel (0) target = $region40
            $region39: #{grassmannian_mapping.3} parent=35 // pred_region
              // Predicated region
              $region59: #{grassmannian_mapping.3} parent=39 // pred_check
                _
              $region60: #{grassmannian_mapping.3} parent=39 // pred_check_branch
                %585 = sbr.rel (0) target = $region62
              $region61: #{grassmannian_mapping.3} parent=39 // pred_region
                %s586 = sshrl.u32 %s464, 5
                // While loop
                $region63: #{grassmannian_mapping.3} parent=61 // loop_pre_header
                  _
                $region64: #{grassmannian_mapping.3} parent=61 // loop_header
                  %s588 = sphi 0, %s590
                  %p589 = scmp.ge.s32.totalorder %s588, %s586
                  %s593 = sphi 0, %s662
                  %s594 = sphi %s457, %s665
                  %s595 = sphi %s468, %s666
                $region65: #{grassmannian_mapping.3} parent=61 // loop_header_branch
                  %592 = sbr.rel (%p589) target = $region69
                $region66: #{grassmannian_mapping.3} parent=61 // loop_body
                  %v596 = vld [vmem:[%s594] sm:$0xff]
                  %597 = vst [vmem:[%s595] sm:$0xff] %v596
                  %v598 = vld [vmem:[%s594 + $0x8] sm:$0xff]
                  %599 = vst [vmem:[%s595 + $0x8] sm:$0xff] %v598
                  %v600 = vld [vmem:[%s594 + $0x10] sm:$0xff]
                  %601 = vst [vmem:[%s595 + $0x10] sm:$0xff] %v600
                  %v602 = vld [vmem:[%s594 + $0x18] sm:$0xff]
                  %603 = vst [vmem:[%s595 + $0x18] sm:$0xff] %v602
                  %v604 = vld [vmem:[%s594 + $0x20] sm:$0xff]
                  %605 = vst [vmem:[%s595 + $0x20] sm:$0xff] %v604
                  %v606 = vld [vmem:[%s594 + $0x28] sm:$0xff]
                  %607 = vst [vmem:[%s595 + $0x28] sm:$0xff] %v606
                  %v608 = vld [vmem:[%s594 + $0x30] sm:$0xff]
                  %609 = vst [vmem:[%s595 + $0x30] sm:$0xff] %v608
                  %v610 = vld [vmem:[%s594 + $0x38] sm:$0xff]
                  %611 = vst [vmem:[%s595 + $0x38] sm:$0xff] %v610
                  %v612 = vld [vmem:[%s594 + $0x40] sm:$0xff]
                  %613 = vst [vmem:[%s595 + $0x40] sm:$0xff] %v612
                  %v614 = vld [vmem:[%s594 + $0x48] sm:$0xff]
                  %615 = vst [vmem:[%s595 + $0x48] sm:$0xff] %v614
                  %v616 = vld [vmem:[%s594 + $0x50] sm:$0xff]
                  %617 = vst [vmem:[%s595 + $0x50] sm:$0xff] %v616
                  %v618 = vld [vmem:[%s594 + $0x58] sm:$0xff]
                  %619 = vst [vmem:[%s595 + $0x58] sm:$0xff] %v618
                  %v620 = vld [vmem:[%s594 + $0x60] sm:$0xff]
                  %621 = vst [vmem:[%s595 + $0x60] sm:$0xff] %v620
                  %v622 = vld [vmem:[%s594 + $0x68] sm:$0xff]
                  %623 = vst [vmem:[%s595 + $0x68] sm:$0xff] %v622
                  %v624 = vld [vmem:[%s594 + $0x70] sm:$0xff]
                  %625 = vst [vmem:[%s595 + $0x70] sm:$0xff] %v624
                  %v626 = vld [vmem:[%s594 + $0x78] sm:$0xff]
                  %627 = vst [vmem:[%s595 + $0x78] sm:$0xff] %v626
                  %v628 = vld [vmem:[%s594 + $0x80] sm:$0xff]
                  %629 = vst [vmem:[%s595 + $0x80] sm:$0xff] %v628
                  %v630 = vld [vmem:[%s594 + $0x88] sm:$0xff]
                  %631 = vst [vmem:[%s595 + $0x88] sm:$0xff] %v630
                  %v632 = vld [vmem:[%s594 + $0x90] sm:$0xff]
                  %633 = vst [vmem:[%s595 + $0x90] sm:$0xff] %v632
                  %v634 = vld [vmem:[%s594 + $0x98] sm:$0xff]
                  %635 = vst [vmem:[%s595 + $0x98] sm:$0xff] %v634
                  %v636 = vld [vmem:[%s594 + $0xa0] sm:$0xff]
                  %637 = vst [vmem:[%s595 + $0xa0] sm:$0xff] %v636
                  %v638 = vld [vmem:[%s594 + $0xa8] sm:$0xff]
                  %639 = vst [vmem:[%s595 + $0xa8] sm:$0xff] %v638
                  %v640 = vld [vmem:[%s594 + $0xb0] sm:$0xff]
                  %641 = vst [vmem:[%s595 + $0xb0] sm:$0xff] %v640
                  %v642 = vld [vmem:[%s594 + $0xb8] sm:$0xff]
                  %643 = vst [vmem:[%s595 + $0xb8] sm:$0xff] %v642
                  %v644 = vld [vmem:[%s594 + $0xc0] sm:$0xff]
                  %645 = vst [vmem:[%s595 + $0xc0] sm:$0xff] %v644
                  %v646 = vld [vmem:[%s594 + $0xc8] sm:$0xff]
                  %647 = vst [vmem:[%s595 + $0xc8] sm:$0xff] %v646
                  %v648 = vld [vmem:[%s594 + $0xd0] sm:$0xff]
                  %649 = vst [vmem:[%s595 + $0xd0] sm:$0xff] %v648
                  %v650 = vld [vmem:[%s594 + $0xd8] sm:$0xff]
                  %651 = vst [vmem:[%s595 + $0xd8] sm:$0xff] %v650
                  %v652 = vld [vmem:[%s594 + $0xe0] sm:$0xff]
                  %653 = vst [vmem:[%s595 + $0xe0] sm:$0xff] %v652
                  %v654 = vld [vmem:[%s594 + $0xe8] sm:$0xff]
                  %655 = vst [vmem:[%s595 + $0xe8] sm:$0xff] %v654
                  %v656 = vld [vmem:[%s594 + $0xf0] sm:$0xff]
                  %657 = vst [vmem:[%s595 + $0xf0] sm:$0xff] %v656
                  %v658 = vld [vmem:[%s594 + $0xf8] sm:$0xff]
                  %659 = vst [vmem:[%s595 + $0xf8] sm:$0xff] %v658
                  %s660 = sadd.s32 1, %s593
                  %p661 = scmp.ge.s32.totalorder %s660, %s586
                  %s662 = scalar_select %p661, 0, %s660
                  %s663 = smul.u32 %s662, 256
                  %s664 = smul.u32 %s662, 256
                  %s665 = scalar_lea.vmem %s457, %s663 [#allocation2]
                  %s666 = scalar_lea.vmem %s468, %s664
                $region67: #{grassmannian_mapping.3} parent=61 // loop_footer
                  %s590 = sadd.s32 %s588, 1
                $region68: #{grassmannian_mapping.3} parent=61 // loop_footer_branch
                  %587 = sbr.rel target = $region64
                $region69: #{grassmannian_mapping.3} parent=61 // loop_exit
                  _
                %s667 = sshrl.u32 %s464, 5
                %s668 = sand.u32 %s464, 31
                %s669 = smul.u32 %s667, 32
                %s670 = smul.u32 8, %s669
                %s671 = scalar_lea.vmem %s457, %s670 [#allocation2]
                %s672 = smul.u32 8, %s669
                %s673 = scalar_lea.vmem %s468, %s672
                // While loop
                $region70: #{grassmannian_mapping.3} parent=61 // loop_pre_header
                  _
                $region71: #{grassmannian_mapping.3} parent=61 // loop_header
                  %s675 = sphi 0, %s677
                  %p676 = scmp.ge.s32.totalorder %s675, %s668
                  %s680 = sphi 0, %s687
                  %s681 = sphi %s671, %s690
                  %s682 = sphi %s673, %s691
                $region72: #{grassmannian_mapping.3} parent=61 // loop_header_branch
                  %679 = sbr.rel (%p676) target = $region76
                $region73: #{grassmannian_mapping.3} parent=61 // loop_body
                  %v683 = vld [vmem:[%s681] sm:$0xff]
                  %684 = vst [vmem:[%s682] sm:$0xff] %v683
                  %s685 = sadd.s32 1, %s680
                  %p686 = scmp.ge.s32.totalorder %s685, %s668
                  %s687 = scalar_select %p686, 0, %s685
                  %s688 = smul.u32 %s687, 8
                  %s689 = smul.u32 %s687, 8
                  %s690 = scalar_lea.vmem %s671, %s688 [#allocation2]
                  %s691 = scalar_lea.vmem %s673, %s689
                $region74: #{grassmannian_mapping.3} parent=61 // loop_footer
                  %s677 = sadd.s32 %s675, 1
                $region75: #{grassmannian_mapping.3} parent=61 // loop_footer_branch
                  %674 = sbr.rel target = $region71
                $region76: #{grassmannian_mapping.3} parent=61 // loop_exit
                  _
              $region62: #{grassmannian_mapping.3} parent=39 // pred_fallthru
                _
              // Predicated region
              $region77: #{grassmannian_mapping.3} parent=39 // pred_check
                _
              $region78: #{grassmannian_mapping.3} parent=39 // pred_check_branch
                %693 = sbr.rel target = $region80
              $region79: #{grassmannian_mapping.3} parent=39 // pred_region
                _
              $region80: #{grassmannian_mapping.3} parent=39 // pred_fallthru
                _
            $region40: #{grassmannian_mapping.3} parent=35 // pred_fallthru
              _
            // Predicated region
            $region41: #{grassmannian_mapping.3} parent=35 // pred_check
              _
            $region42: #{grassmannian_mapping.3} parent=35 // pred_check_branch
              %475 = sbr.rel target = $region44
            $region43: #{grassmannian_mapping.3} parent=35 // pred_region
              %s477 = ssub.s32 256, 1
              %s478 = sshrl.u32 %s464, 5
              // While loop
              $region45: #{grassmannian_mapping.3} parent=43 // loop_pre_header
                _
              $region46: #{grassmannian_mapping.3} parent=43 // loop_header
                %s480 = sphi 0, %s482
                %p481 = scmp.ge.s32.totalorder %s480, %s478
                %s485 = sphi 0, %s554
                %s486 = sphi %s457, %s557
                %s487 = sphi %s468, %s558
              $region47: #{grassmannian_mapping.3} parent=43 // loop_header_branch
                %484 = sbr.rel (%p481) target = $region51
              $region48: #{grassmannian_mapping.3} parent=43 // loop_body
                %v488 = vld [vmem:[%s486] sm:%s477]
                %489 = vst [vmem:[%s487] sm:%s477] %v488
                %v490 = vld [vmem:[%s486 + $0x8] sm:%s477]
                %491 = vst [vmem:[%s487 + $0x8] sm:%s477] %v490
                %v492 = vld [vmem:[%s486 + $0x10] sm:%s477]
                %493 = vst [vmem:[%s487 + $0x10] sm:%s477] %v492
                %v494 = vld [vmem:[%s486 + $0x18] sm:%s477]
                %495 = vst [vmem:[%s487 + $0x18] sm:%s477] %v494
                %v496 = vld [vmem:[%s486 + $0x20] sm:%s477]
                %497 = vst [vmem:[%s487 + $0x20] sm:%s477] %v496
                %v498 = vld [vmem:[%s486 + $0x28] sm:%s477]
                %499 = vst [vmem:[%s487 + $0x28] sm:%s477] %v498
                %v500 = vld [vmem:[%s486 + $0x30] sm:%s477]
                %501 = vst [vmem:[%s487 + $0x30] sm:%s477] %v500
                %v502 = vld [vmem:[%s486 + $0x38] sm:%s477]
                %503 = vst [vmem:[%s487 + $0x38] sm:%s477] %v502
                %v504 = vld [vmem:[%s486 + $0x40] sm:%s477]
                %505 = vst [vmem:[%s487 + $0x40] sm:%s477] %v504
                %v506 = vld [vmem:[%s486 + $0x48] sm:%s477]
                %507 = vst [vmem:[%s487 + $0x48] sm:%s477] %v506
                %v508 = vld [vmem:[%s486 + $0x50] sm:%s477]
                %509 = vst [vmem:[%s487 + $0x50] sm:%s477] %v508
                %v510 = vld [vmem:[%s486 + $0x58] sm:%s477]
                %511 = vst [vmem:[%s487 + $0x58] sm:%s477] %v510
                %v512 = vld [vmem:[%s486 + $0x60] sm:%s477]
                %513 = vst [vmem:[%s487 + $0x60] sm:%s477] %v512
                %v514 = vld [vmem:[%s486 + $0x68] sm:%s477]
                %515 = vst [vmem:[%s487 + $0x68] sm:%s477] %v514
                %v516 = vld [vmem:[%s486 + $0x70] sm:%s477]
                %517 = vst [vmem:[%s487 + $0x70] sm:%s477] %v516
                %v518 = vld [vmem:[%s486 + $0x78] sm:%s477]
                %519 = vst [vmem:[%s487 + $0x78] sm:%s477] %v518
                %v520 = vld [vmem:[%s486 + $0x80] sm:%s477]
                %521 = vst [vmem:[%s487 + $0x80] sm:%s477] %v520
                %v522 = vld [vmem:[%s486 + $0x88] sm:%s477]
                %523 = vst [vmem:[%s487 + $0x88] sm:%s477] %v522
                %v524 = vld [vmem:[%s486 + $0x90] sm:%s477]
                %525 = vst [vmem:[%s487 + $0x90] sm:%s477] %v524
                %v526 = vld [vmem:[%s486 + $0x98] sm:%s477]
                %527 = vst [vmem:[%s487 + $0x98] sm:%s477] %v526
                %v528 = vld [vmem:[%s486 + $0xa0] sm:%s477]
                %529 = vst [vmem:[%s487 + $0xa0] sm:%s477] %v528
                %v530 = vld [vmem:[%s486 + $0xa8] sm:%s477]
                %531 = vst [vmem:[%s487 + $0xa8] sm:%s477] %v530
                %v532 = vld [vmem:[%s486 + $0xb0] sm:%s477]
                %533 = vst [vmem:[%s487 + $0xb0] sm:%s477] %v532
                %v534 = vld [vmem:[%s486 + $0xb8] sm:%s477]
                %535 = vst [vmem:[%s487 + $0xb8] sm:%s477] %v534
                %v536 = vld [vmem:[%s486 + $0xc0] sm:%s477]
                %537 = vst [vmem:[%s487 + $0xc0] sm:%s477] %v536
                %v538 = vld [vmem:[%s486 + $0xc8] sm:%s477]
                %539 = vst [vmem:[%s487 + $0xc8] sm:%s477] %v538
                %v540 = vld [vmem:[%s486 + $0xd0] sm:%s477]
                %541 = vst [vmem:[%s487 + $0xd0] sm:%s477] %v540
                %v542 = vld [vmem:[%s486 + $0xd8] sm:%s477]
                %543 = vst [vmem:[%s487 + $0xd8] sm:%s477] %v542
                %v544 = vld [vmem:[%s486 + $0xe0] sm:%s477]
                %545 = vst [vmem:[%s487 + $0xe0] sm:%s477] %v544
                %v546 = vld [vmem:[%s486 + $0xe8] sm:%s477]
                %547 = vst [vmem:[%s487 + $0xe8] sm:%s477] %v546
                %v548 = vld [vmem:[%s486 + $0xf0] sm:%s477]
                %549 = vst [vmem:[%s487 + $0xf0] sm:%s477] %v548
                %v550 = vld [vmem:[%s486 + $0xf8] sm:%s477]
                %551 = vst [vmem:[%s487 + $0xf8] sm:%s477] %v550
                %s552 = sadd.s32 1, %s485
                %p553 = scmp.ge.s32.totalorder %s552, %s478
                %s554 = scalar_select %p553, 0, %s552
                %s555 = smul.u32 %s554, 256
                %s556 = smul.u32 %s554, 256
                %s557 = scalar_lea.vmem %s457, %s555 [#allocation2]
                %s558 = scalar_lea.vmem %s468, %s556
              $region49: #{grassmannian_mapping.3} parent=43 // loop_footer
                %s482 = sadd.s32 %s480, 1
              $region50: #{grassmannian_mapping.3} parent=43 // loop_footer_branch
                %479 = sbr.rel target = $region46
              $region51: #{grassmannian_mapping.3} parent=43 // loop_exit
                _
              %s559 = sshrl.u32 %s464, 5
              %s560 = sand.u32 %s464, 31
              %s561 = smul.u32 %s559, 32
              %s562 = smul.u32 8, %s561
              %s563 = scalar_lea.vmem %s457, %s562 [#allocation2]
              %s564 = smul.u32 8, %s561
              %s565 = scalar_lea.vmem %s468, %s564
              // While loop
              $region52: #{grassmannian_mapping.3} parent=43 // loop_pre_header
                _
              $region53: #{grassmannian_mapping.3} parent=43 // loop_header
                %s567 = sphi 0, %s569
                %p568 = scmp.ge.s32.totalorder %s567, %s560
                %s572 = sphi 0, %s579
                %s573 = sphi %s563, %s582
                %s574 = sphi %s565, %s583
              $region54: #{grassmannian_mapping.3} parent=43 // loop_header_branch
                %571 = sbr.rel (%p568) target = $region58
              $region55: #{grassmannian_mapping.3} parent=43 // loop_body
                %v575 = vld [vmem:[%s573] sm:%s477]
                %576 = vst [vmem:[%s574] sm:%s477] %v575
                %s577 = sadd.s32 1, %s572
                %p578 = scmp.ge.s32.totalorder %s577, %s560
                %s579 = scalar_select %p578, 0, %s577
                %s580 = smul.u32 %s579, 8
                %s581 = smul.u32 %s579, 8
                %s582 = scalar_lea.vmem %s563, %s580 [#allocation2]
                %s583 = scalar_lea.vmem %s565, %s581
              $region56: #{grassmannian_mapping.3} parent=43 // loop_footer
                %s569 = sadd.s32 %s567, 1
              $region57: #{grassmannian_mapping.3} parent=43 // loop_footer_branch
                %566 = sbr.rel target = $region53
              $region58: #{grassmannian_mapping.3} parent=43 // loop_exit
                _
            $region44: #{grassmannian_mapping.3} parent=35 // pred_fallthru
              _
          $region36: #{grassmannian_mapping.3} parent=31 // pred_fallthru
            _
          %694 = vnop
        $region32: #{grassmannian_mapping.3} parent=27 // pred_fallthru
          _
      $region28: #{grassmannian_mapping.3} parent=5 // pred_fallthru
        _
      %p695 = scmp.le.s32.totalorder 2, %s8
      // Predicated region
      $region81: #{grassmannian_mapping.3} parent=5 // pred_check
        %p696 = pneg %p695
      $region82: #{grassmannian_mapping.3} parent=5 // pred_check_branch
        %698 = sbr.rel (%p696) target = $region84
      $region83: #{grassmannian_mapping.3} parent=5 // pred_region
        %s699 = ssub.s32 %s8, 2
        // Predicated region
        $region85: #{grassmannian_mapping.3} parent=83 // pred_check
          %p700 = pneg %p84
        $region86: #{grassmannian_mapping.3} parent=83 // pred_check_branch
          %702 = sbr.rel (%p700) target = $region88
        $region87: #{grassmannian_mapping.3} parent=83 // pred_region
          %s703 = sand.u32 %s69, 1
          %s704 = sand.u32 %s69, 1
          %s705 = smul.addr %s704, 256
          %s706 = scalar_lea.vmem [#allocation2], %s705
        $region88: #{grassmannian_mapping.3} parent=83 // pred_fallthru
          _
      $region84: #{grassmannian_mapping.3} parent=5 // pred_fallthru
        _
    $region6: #{grassmannian_mapping.3} parent=1 // loop_footer
      %s12 = sadd.s32 1, %s8
    $region7: #{grassmannian_mapping.3} parent=1 // loop_footer_branch
      %7 = sbr.rel target = $region3
    $region8: #{grassmannian_mapping.3} parent=1 // loop_exit
      _

</llo_original>
